<compile_context>
chip_gen: v7x
topology: tpu7x:2x2x1
jax: 0.10.0
libtpu: 0.0.40
codegen_flags: <defaults>
</compile_context>

<pallas_src>
import jax
import jax.numpy as jnp
from jax.experimental import pallas as pl
from jax.experimental.pallas import tpu as pltpu


def _cdiv(a, b):
    return -(-a // b)


def _round_up(x, m):
    return _cdiv(x, m) * m


def _refine_kernel(bx_ref, x_ref, br_ref, w_ref, shift_ref, o_ref):
    # 1x1 conv as (planes, K) @ (K, TILE_M); BN scale already folded into w.
    y = jnp.dot(w_ref[...], bx_ref[...], preferred_element_type=jnp.float32)
    # folded conv-bias + BN shift, then ReLU
    y = jnp.maximum(y + shift_ref[...], 0.0)
    # gate = torch.sum(branch, dim=1) broadcast ("repeat") across the planes.
    # Reduction is along the channel (sublane) axis -> OOB lane columns of a
    # partial final block stay isolated and are masked on store.
    gate = jnp.sum(br_ref[...].astype(jnp.float32), axis=0, keepdims=True)
    # gate * conv-path + residual, cast back to the I/O dtype
    o_ref[...] = (y * gate + x_ref[...].astype(jnp.float32)).astype(o_ref.dtype)


def _choose_tile(M, bytes_per_col, *, vmem_budget_bytes, min_steps=2):
    """Largest 128-aligned spatial tile whose double-buffered per-step blocks fit
    the VMEM budget; the grid is split into >= `min_steps` (even, roughly equal)
    steps so v7x's two TensorCores stay balanced (harmless on 1-TC v5e/v6e)."""
    m128 = _round_up(M, 128)
    max_tile = max(128, (vmem_budget_bytes // (2 * bytes_per_col)) // 128 * 128)
    steps = _cdiv(m128, max_tile)
    if m128 >= 256:
        steps = max(steps, min_steps)
        if steps % 2:
            steps += 1
    tile = min(max_tile, _round_up(_cdiv(m128, steps), 128))
    return tile


def refine_unit_pallas(x, b_x, branch, w, bias, bn_gamma, bn_beta, bn_mean, bn_var,
                       *, eps=1e-5, vmem_budget_bytes=24 << 20):
    """x: (1, planes, H, W); b_x: (1, inplanes, H, W); branch: (1, Cb, H, W).

    w:    (planes, inplanes)  -- squeezed 1x1 conv weight (PyTorch layout)
    bias: (planes,)           -- conv bias
    bn_*: (planes,)           -- BatchNorm2d params / running stats (eval mode)
    """
    N, planes, H, W = x.shape
    assert N == 1, "PyTorch `branch.repeat(1, planes, 1, 1)` semantics require batch == 1"
    _, inplanes, _, _ = b_x.shape
    _, cb, _, _ = branch.shape

    M = H * W
    out_dtype = x.dtype
    compute_dtype = b_x.dtype

    # NCHW with N == 1 is already channels-first (C, H*W): free reshape, no transpose.
    x_cm = x.reshape(planes, M)
    bx_cm = b_x.reshape(inplanes, M)
    br_cm = branch.reshape(cb, M)

    # Fold BN (eval) + conv bias:
    #   BN(w@bx + bias) = (w*scale) @ bx + (bias*scale + beta - mean*scale)
    scale = bn_gamma.astype(jnp.float32) / jnp.sqrt(bn_var.astype(jnp.float32) + eps)
    w_folded = (w.astype(jnp.float32) * scale[:, None]).astype(compute_dtype)   # (planes, inplanes)
    shift = (bias.astype(jnp.float32) * scale
             + bn_beta.astype(jnp.float32)
             - bn_mean.astype(jnp.float32) * scale).reshape(planes, 1)          # (planes, 1) f32

    # --- tile / grid selection from a VMEM budget (generation-safe) ---------
    bx_item = jnp.dtype(b_x.dtype).itemsize
    br_item = jnp.dtype(branch.dtype).itemsize
    xo_item = jnp.dtype(out_dtype).itemsize
    bytes_per_col = inplanes * bx_item + cb * br_item + 2 * planes * xo_item  # in + out streams
    tile = _choose_tile(M, bytes_per_col, vmem_budget_bytes=vmem_budget_bytes)
    grid = (_cdiv(M, tile),)

    # Scoped-VMEM limit: double-buffered per-step blocks + weights + margin,
    # kept well under v7x's 64 MiB physical VMEM (also raises v5e's 16 MiB default).
    w_bytes = planes * inplanes * jnp.dtype(compute_dtype).itemsize + planes * 4
    vmem_need = 2 * tile * bytes_per_col + 2 * w_bytes
    vmem_limit_bytes = int(min(48 << 20, max(16 << 20, vmem_need + (4 << 20))))

    cost = pl.CostEstimate(
        flops=2 * planes * inplanes * M,
        transcendentals=0,
        bytes_accessed=(M * (inplanes * bx_item + cb * br_item + 2 * planes * xo_item)
                        + w_bytes),
    )

    out_cm = pl.pallas_call(
        _refine_kernel,
        out_shape=jax.ShapeDtypeStruct((planes, M), out_dtype),
        grid_spec=pltpu.PrefetchScalarGridSpec(
            num_scalar_prefetch=0,
            grid=grid,
            in_specs=[
                pl.BlockSpec((inplanes, tile), lambda i: (0, i)),      # b_x tile
                pl.BlockSpec((planes, tile), lambda i: (0, i)),        # x (residual) tile
                pl.BlockSpec((cb, tile), lambda i: (0, i)),            # branch tile
                pl.BlockSpec((planes, inplanes), lambda i: (0, 0)),    # folded conv weight
                pl.BlockSpec((planes, 1), lambda i: (0, 0)),           # folded bias/BN shift
            ],
            out_specs=pl.BlockSpec((planes, tile), lambda i: (0, i)),
        ),
        # residual x (input 1) aliases the output: output block i only depends on
        # input blocks i, so this is safe and saves an output HBM allocation.
        input_output_aliases={1: 0},
        compiler_params=pltpu.CompilerParams(
            dimension_semantics=("parallel",),
            vmem_limit_bytes=vmem_limit_bytes,
        ),
        cost_estimate=cost,
    )(bx_cm, x_cm, br_cm, w_folded, shift)

    # (planes, M) -> (1, planes, H, W): free reshape (already channels-first)
    return out_cm.reshape(1, planes, H, W)


def refine_unit_ref(x, b_x, branch, w, bias, bn_gamma, bn_beta, bn_mean, bn_var, eps=1e-5):
    """Pure-JAX reference mirroring the PyTorch forward (batch = 1, BN eval)."""
    y = jnp.einsum("nchw,pc->nphw", b_x, w) + bias[None, :, None, None]
    scale = bn_gamma / jnp.sqrt(bn_var + eps)
    y = y * scale[None, :, None, None] + (bn_beta - bn_mean * scale)[None, :, None, None]
    y = jnp.maximum(y, 0.0)
    # torch.sum(branch, 1) + repeat(1, planes, 1, 1) == broadcast channel-sum (N=1)
    br = jnp.sum(branch, axis=1, keepdims=True)
    return y * br + x


if __name__ == "__main__":
    key = jax.random.PRNGKey(0)
    ks = jax.random.split(key, 8)

    # Shapes matching FCN.refineunit1 = RefineUnit(128, 64); `branch` has
    # num_classes channels.  H*W = 1728 is NOT a multiple of 128 so the masked
    # partial-final-block path is exercised (no wrapper-side padding anymore).
    N, inplanes, planes, H, W = 1, 128, 64, 48, 36
    cb = 8  # num_classes

    x = jax.random.normal(ks[0], (N, planes, H, W), jnp.float32)
    b_x = jax.random.normal(ks[1], (N, inplanes, H, W), jnp.float32)
    branch = jax.random.normal(ks[2], (N, cb, H, W), jnp.float32)

    # Deterministic synthetic parameters (shapes from RefineUnit.__init__)
    w = 0.1 * jax.random.normal(ks[3], (planes, inplanes), jnp.float32)   # conv1.weight (1x1, squeezed)
    bias = 0.05 * jax.random.normal(ks[4], (planes,), jnp.float32)        # conv1.bias
    bn_gamma = 1.0 + 0.1 * jax.random.normal(ks[5], (planes,), jnp.float32)
    bn_beta = 0.1 * jax.random.normal(ks[6], (planes,), jnp.float32)
    bn_mean = 0.05 * jax.random.normal(ks[7], (planes,), jnp.float32)
    bn_var = jnp.ones((planes,), jnp.float32)

    fn = jax.jit(refine_unit_pallas)
    out = jax.block_until_ready(
        fn(x, b_x, branch, w, bias, bn_gamma, bn_beta, bn_mean, bn_var))

    ref = refine_unit_ref(x, b_x, branch, w, bias, bn_gamma, bn_beta, bn_mean, bn_var)
    assert out.shape == (N, planes, H, W)
    assert jnp.allclose(out, ref, atol=1e-3, rtol=1e-3), "mismatch vs reference"

    print("KERNEL_OK")
</pallas_src>

<mosaic_0001>
module attributes {stable_mosaic.version = 11 : i64} {
  func.func @_refine_kernel(%arg0: i32, %arg1: memref<128x896xf32, #tpu.memory_space<vmem>>, %arg2: memref<64x896xf32, #tpu.memory_space<vmem>>, %arg3: memref<8x896xf32, #tpu.memory_space<vmem>>, %arg4: memref<64x128xf32, #tpu.memory_space<vmem>>, %arg5: memref<64x1xf32, #tpu.memory_space<vmem>>, %arg6: memref<64x896xf32, #tpu.memory_space<vmem>>) attributes {dimension_semantics = [#tpu.dimension_semantics<parallel>], iteration_bounds = array<i64: 2>, scalar_prefetch = 0 : i64, scratch_operands = 0 : i64, tpu.core_type = #tpu.core_type<tc>, window_params = [{transform_indices = @transform_0, window_bounds = array<i64: 128, 896>}, {transform_indices = @transform_1, window_bounds = array<i64: 64, 896>}, {transform_indices = @transform_2, window_bounds = array<i64: 8, 896>}, {pipeline_mode = #tpu.pipeline_mode<synchronous>, transform_indices = @transform_3, window_bounds = array<i64: 64, 128>}, {pipeline_mode = #tpu.pipeline_mode<synchronous>, transform_indices = @transform_4, window_bounds = array<i64: 64, 1>}, {transform_indices = @transform_5, window_bounds = array<i64: 64, 896>}]} {
    %c0 = arith.constant 0 : index
    %c0_0 = arith.constant 0 : index
    %0 = vector.load %arg4[%c0, %c0_0] : memref<64x128xf32, #tpu.memory_space<vmem>>, vector<64x128xf32>
    %c0_1 = arith.constant 0 : index
    %c0_2 = arith.constant 0 : index
    %1 = vector.load %arg1[%c0_1, %c0_2] : memref<128x896xf32, #tpu.memory_space<vmem>>, vector<128x896xf32>
    %cst = arith.constant dense<0.000000e+00> : vector<64x896xf32>
    %2 = tpu.matmul %0, %1, %cst {dimension_numbers = #tpu.dot_dimension_numbers<[1], [0], [0], [1], [0, 0, 1, 1], [], []>} : vector<64x128xf32>, vector<128x896xf32>, vector<64x896xf32> -> vector<64x896xf32>
    %c0_3 = arith.constant 0 : index
    %c0_4 = arith.constant 0 : index
    %3 = vector.load %arg5[%c0_3, %c0_4] : memref<64x1xf32, #tpu.memory_space<vmem>>, vector<64x1xf32>
    %4 = vector.broadcast %3 : vector<64x1xf32> to vector<64x896xf32>
    %5 = arith.addf %2, %4 : vector<64x896xf32>
    %cst_5 = arith.constant 0.000000e+00 : f32
    %6 = vector.broadcast %cst_5 : f32 to vector<64x896xf32>
    %7 = arith.maximumf %5, %6 : vector<64x896xf32>
    %c0_6 = arith.constant 0 : index
    %c0_7 = arith.constant 0 : index
    %8 = vector.load %arg3[%c0_6, %c0_7] : memref<8x896xf32, #tpu.memory_space<vmem>>, vector<8x896xf32>
    %cst_8 = arith.constant dense<0.000000e+00> : vector<896xf32>
    %9 = vector.multi_reduction <add>, %8, %cst_8 [0] : vector<8x896xf32> to vector<896xf32>
    %10 = vector.shape_cast %9 : vector<896xf32> to vector<1x896xf32>
    %11 = vector.broadcast %10 : vector<1x896xf32> to vector<64x896xf32>
    %12 = arith.mulf %7, %11 : vector<64x896xf32>
    %c0_9 = arith.constant 0 : index
    %c0_10 = arith.constant 0 : index
    %13 = vector.load %arg2[%c0_9, %c0_10] : memref<64x896xf32, #tpu.memory_space<vmem>>, vector<64x896xf32>
    %14 = arith.addf %12, %13 : vector<64x896xf32>
    %c0_11 = arith.constant 0 : index
    %c0_12 = arith.constant 0 : index
    %15 = vector.load %arg6[%c0_11, %c0_12] : memref<64x896xf32, #tpu.memory_space<vmem>>, vector<64x896xf32>
    tpu.vector_store %arg6[%c0_11, %c0_12], %14 {strides = array<i32>} : memref<64x896xf32, #tpu.memory_space<vmem>>, vector<64x896xf32>,
    return
  }
  func.func @transform_0(%arg0: i32) -> (i32, i32) {
    %c0_i32 = arith.constant 0 : i32
    %c0_i32_0 = arith.constant 0 : i32
    return %c0_i32, %arg0 : i32, i32
  }
  func.func @transform_1(%arg0: i32) -> (i32, i32) {
    %c0_i32 = arith.constant 0 : i32
    %c0_i32_0 = arith.constant 0 : i32
    return %c0_i32, %arg0 : i32, i32
  }
  func.func @transform_2(%arg0: i32) -> (i32, i32) {
    %c0_i32 = arith.constant 0 : i32
    %c0_i32_0 = arith.constant 0 : i32
    return %c0_i32, %arg0 : i32, i32
  }
  func.func @transform_3(%arg0: i32) -> (i32, i32) {
    %c0_i32 = arith.constant 0 : i32
    %c0_i32_0 = arith.constant 0 : i32
    %c0_i32_1 = arith.constant 0 : i32
    return %c0_i32, %c0_i32_0 : i32, i32
  }
  func.func @transform_4(%arg0: i32) -> (i32, i32) {
    %c0_i32 = arith.constant 0 : i32
    %c0_i32_0 = arith.constant 0 : i32
    %c0_i32_1 = arith.constant 0 : i32
    return %c0_i32, %c0_i32_0 : i32, i32
  }
  func.func @transform_5(%arg0: i32) -> (i32, i32) {
    %c0_i32 = arith.constant 0 : i32
    %c0_i32_0 = arith.constant 0 : i32
    return %c0_i32, %arg0 : i32, i32
  }
}

</mosaic_0001>

<llo_original>
// kernel: refine_unit_pallas.1
$region0: #{refine_unit_pallas.1}
  #allocation0 [shape = 'u32[]', space=smem, size = 0x4, offset = 0x4, fixed_abs, tag = 'smem constant byte address 0x4 - core index']
  #allocation1 [shape = 'u32[144,128]{1,0:T(1,128)}', space=vmem, size = 0x12000, scoped, tag = 'internal scratch']
  %s0 = inlined_call_operand.vmem [shape: f32[128,1728], index: 0, kind: input, shape index: {}]
  %s1 = inlined_call_operand.vmem [shape: f32[64,1728], index: 1, kind: input, shape index: {}, may-alias: {1,5}]
  %s2 = inlined_call_operand.vmem [shape: f32[8,1728], index: 2, kind: input, shape index: {}]
  %s3 = inlined_call_operand.vmem [shape: f32[64,128], index: 3, kind: input, shape index: {}]
  %s4 = inlined_call_operand.vmem [shape: f32[64,1], index: 4, kind: input, shape index: {}]
  %s5 = inlined_call_operand.vmem [shape: f32[64,1728], index: 5, kind: output, shape index: {}, may-alias: {1,5}]
  %s6 = sld [smem:[#allocation0]]
  $region118: #{refine_unit_pallas.1} parent=0
    _
  %s8 = ssub.s32 1, %s6
  %s9 = scalar_select 0, %s8, %s6
  $region1: #{refine_unit_pallas.1} parent=0
    #allocation2 [shape = 'u8[917504]{0}', space=vmem, size = 0xe0000, scoped, tag = 'input window, operand 0']
    #allocation3 [shape = 'u8[458752]{0}', space=vmem, size = 0x70000, scoped, tag = 'input window, operand 1']
    #allocation4 [shape = 'u8[458752]{0}', space=vmem, size = 0x70000, scoped, tag = 'output window, operand 0']
    loop: start=0, step=1, limit=4
    $region2: #{refine_unit_pallas.1} parent=1 // loop_pre_header
      _
    $region3: #{refine_unit_pallas.1} parent=1 // loop_header
      %s11 = sphi 0, %s15
      %p12 = scmp.ge.s32.totalorder %s11, 4
      %s21 = sphi 0, %s23
      %s24 = sphi 0, %s21
      %s25 = sphi 0, %s24
      %s41 = sphi 0, %s25
      %s47 = sphi 0, %s49
      %s50 = sphi 0, %s47
      %s51 = sphi 0, %s50
      %s67 = sphi 0, %s51
      %s73 = sphi 0, %s75
      %s76 = sphi 0, %s73
      %s77 = sphi 0, %s76
      %s93 = sphi 0, %s77
      %s97 = sphi 0, %s97
      %s99 = sphi 0, %s97
      %s100 = sphi 0, %s99
      %s114 = sphi 0, %s100
      %s118 = sphi 0, %s118
      %s120 = sphi 0, %s118
      %s121 = sphi 0, %s120
      %s135 = sphi 0, %s121
      %s141 = sphi 0, %s143
      %s144 = sphi 0, %s141
      %s145 = sphi 0, %s144
      %s161 = sphi 0, %s145
    $region4: #{refine_unit_pallas.1} parent=1 // loop_header_branch
      %14 = sbr.rel (%p12) target = $region8
    $region5: #{refine_unit_pallas.1} parent=1 // loop_body
      %s16 = ssub.s32 %s11, 1
      %s17 = ssub.s32 %s11, 2
      %s18 = sadd.s32 %s11, 1
      %s19 = ssub.s32 %s11, %s18
      %p20 = scmp.eq.s32.totalorder %s19, 0
      %s22 = sadd.s32 %s21, 1
      %s23 = scalar_select %p20, %s21, %s22
      %p26 = pneg %p20
      %p27 = scmp.eq.s32.totalorder %s11, 1
      %p28 = por %p26, %p27
      %p29 = scmp.ne.s32.totalorder %s21, %s24
      %p30 = scmp.eq.s32.totalorder %s11, 0
      %p31 = por %p29, %p30
      %p32 = scmp.ne.s32.totalorder %s21, %s24
      %p33 = scmp.eq.s32.totalorder %s16, 1
      %p34 = por %p32, %p33
      %p35 = scmp.ne.s32.totalorder %s24, %s25
      %p36 = scmp.eq.s32.totalorder %s16, 0
      %p37 = por %p35, %p36
      %p38 = scmp.ne.s32.totalorder %s24, %s25
      %p39 = scmp.eq.s32.totalorder %s17, 1
      %p40 = por %p38, %p39
      %p42 = scmp.ne.s32.totalorder %s25, %s41
      %p43 = scmp.eq.s32.totalorder %s17, 0
      %p44 = por %p42, %p43
      %s45 = ssub.s32 %s11, %s18
      %p46 = scmp.eq.s32.totalorder %s45, 0
      %s48 = sadd.s32 %s47, 1
      %s49 = scalar_select %p46, %s47, %s48
      %p52 = pneg %p46
      %p53 = scmp.eq.s32.totalorder %s11, 1
      %p54 = por %p52, %p53
      %p55 = scmp.ne.s32.totalorder %s47, %s50
      %p56 = scmp.eq.s32.totalorder %s11, 0
      %p57 = por %p55, %p56
      %p58 = scmp.ne.s32.totalorder %s47, %s50
      %p59 = scmp.eq.s32.totalorder %s16, 1
      %p60 = por %p58, %p59
      %p61 = scmp.ne.s32.totalorder %s50, %s51
      %p62 = scmp.eq.s32.totalorder %s16, 0
      %p63 = por %p61, %p62
      %p64 = scmp.ne.s32.totalorder %s50, %s51
      %p65 = scmp.eq.s32.totalorder %s17, 1
      %p66 = por %p64, %p65
      %p68 = scmp.ne.s32.totalorder %s51, %s67
      %p69 = scmp.eq.s32.totalorder %s17, 0
      %p70 = por %p68, %p69
      %s71 = ssub.s32 %s11, %s18
      %p72 = scmp.eq.s32.totalorder %s71, 0
      %s74 = sadd.s32 %s73, 1
      %s75 = scalar_select %p72, %s73, %s74
      %p78 = pneg %p72
      %p79 = scmp.eq.s32.totalorder %s11, 1
      %p80 = por %p78, %p79
      %p81 = scmp.ne.s32.totalorder %s73, %s76
      %p82 = scmp.eq.s32.totalorder %s11, 0
      %p83 = por %p81, %p82
      %p84 = scmp.ne.s32.totalorder %s73, %s76
      %p85 = scmp.eq.s32.totalorder %s16, 1
      %p86 = por %p84, %p85
      %p87 = scmp.ne.s32.totalorder %s76, %s77
      %p88 = scmp.eq.s32.totalorder %s16, 0
      %p89 = por %p87, %p88
      %p90 = scmp.ne.s32.totalorder %s76, %s77
      %p91 = scmp.eq.s32.totalorder %s17, 1
      %p92 = por %p90, %p91
      %p94 = scmp.ne.s32.totalorder %s77, %s93
      %p95 = scmp.eq.s32.totalorder %s17, 0
      %p96 = por %p94, %p95
      %s98 = sadd.s32 %s97, 1
      %p101 = scmp.eq.s32.totalorder %s11, 1
      %p102 = scmp.ne.s32.totalorder %s97, %s99
      %p103 = scmp.eq.s32.totalorder %s11, 0
      %p104 = por %p102, %p103
      %p105 = scmp.ne.s32.totalorder %s97, %s99
      %p106 = scmp.eq.s32.totalorder %s16, 1
      %p107 = por %p105, %p106
      %p108 = scmp.ne.s32.totalorder %s99, %s100
      %p109 = scmp.eq.s32.totalorder %s16, 0
      %p110 = por %p108, %p109
      %p111 = scmp.ne.s32.totalorder %s99, %s100
      %p112 = scmp.eq.s32.totalorder %s17, 1
      %p113 = por %p111, %p112
      %p115 = scmp.ne.s32.totalorder %s100, %s114
      %p116 = scmp.eq.s32.totalorder %s17, 0
      %p117 = por %p115, %p116
      %s119 = sadd.s32 %s118, 1
      %p122 = scmp.eq.s32.totalorder %s11, 1
      %p123 = scmp.ne.s32.totalorder %s118, %s120
      %p124 = scmp.eq.s32.totalorder %s11, 0
      %p125 = por %p123, %p124
      %p126 = scmp.ne.s32.totalorder %s118, %s120
      %p127 = scmp.eq.s32.totalorder %s16, 1
      %p128 = por %p126, %p127
      %p129 = scmp.ne.s32.totalorder %s120, %s121
      %p130 = scmp.eq.s32.totalorder %s16, 0
      %p131 = por %p129, %p130
      %p132 = scmp.ne.s32.totalorder %s120, %s121
      %p133 = scmp.eq.s32.totalorder %s17, 1
      %p134 = por %p132, %p133
      %p136 = scmp.ne.s32.totalorder %s121, %s135
      %p137 = scmp.eq.s32.totalorder %s17, 0
      %p138 = por %p136, %p137
      %s139 = ssub.s32 %s11, %s18
      %p140 = scmp.eq.s32.totalorder %s139, 0
      %s142 = sadd.s32 %s141, 1
      %s143 = scalar_select %p140, %s141, %s142
      %p146 = pneg %p140
      %p147 = scmp.eq.s32.totalorder %s11, 1
      %p148 = por %p146, %p147
      %p149 = scmp.ne.s32.totalorder %s141, %s144
      %p150 = scmp.eq.s32.totalorder %s11, 0
      %p151 = por %p149, %p150
      %p152 = scmp.ne.s32.totalorder %s141, %s144
      %p153 = scmp.eq.s32.totalorder %s16, 1
      %p154 = por %p152, %p153
      %p155 = scmp.ne.s32.totalorder %s144, %s145
      %p156 = scmp.eq.s32.totalorder %s16, 0
      %p157 = por %p155, %p156
      %p158 = scmp.ne.s32.totalorder %s144, %s145
      %p159 = scmp.eq.s32.totalorder %s17, 1
      %p160 = por %p158, %p159
      %p162 = scmp.ne.s32.totalorder %s145, %s161
      %p163 = scmp.eq.s32.totalorder %s17, 0
      %p164 = por %p162, %p163
      %p165 = scmp.le.s32.totalorder 1, %s11
      %p166 = scmp.lt.s32.totalorder %s11, 3
      %p167 = pnand %p165, %p166
      %p168 = pneg %p167
      // Predicated region
      $region9: #{refine_unit_pallas.1} parent=5 // pred_check
        _
      $region10: #{refine_unit_pallas.1} parent=5 // pred_check_branch
        %170 = sbr.rel (%p167) target = $region12
      $region11: #{refine_unit_pallas.1} parent=5 // pred_region
        %s171 = ssub.s32 %s11, 1
        // Predicated region
        $region13: #{refine_unit_pallas.1} parent=11 // pred_check
          %p172 = pneg %p110
        $region14: #{refine_unit_pallas.1} parent=11 // pred_check_branch
          %174 = sbr.rel (%p172) target = $region16
        $region15: #{refine_unit_pallas.1} parent=11 // pred_region
          _
        $region16: #{refine_unit_pallas.1} parent=11 // pred_fallthru
          _
        // Predicated region
        $region17: #{refine_unit_pallas.1} parent=11 // pred_check
          %p175 = pneg %p131
        $region18: #{refine_unit_pallas.1} parent=11 // pred_check_branch
          %177 = sbr.rel (%p175) target = $region20
        $region19: #{refine_unit_pallas.1} parent=11 // pred_region
          _
        $region20: #{refine_unit_pallas.1} parent=11 // pred_fallthru
          _
      $region12: #{refine_unit_pallas.1} parent=5 // pred_fallthru
        _
      %p178 = scmp.lt.s32.totalorder %s11, 2
      // Predicated region
      $region21: #{refine_unit_pallas.1} parent=5 // pred_check
        %p179 = pneg %p178
      $region22: #{refine_unit_pallas.1} parent=5 // pred_check_branch
        %181 = sbr.rel (%p179) target = $region24
      $region23: #{refine_unit_pallas.1} parent=5 // pred_region
        // Predicated region
        $region25: #{refine_unit_pallas.1} parent=23 // pred_check
          %p182 = pneg %p31
        $region26: #{refine_unit_pallas.1} parent=23 // pred_check_branch
          %184 = sbr.rel (%p182) target = $region28
        $region27: #{refine_unit_pallas.1} parent=23 // pred_region
          %s185 = sand.u32 %s21, 1
          %s186 = sand.u32 %s21, 1
          %s187 = smul.addr %s186, 896
          %s188 = scalar_lea.vmem [#allocation2], %s187
          %s189 = smul.u32 7, %s11
          %s190 = smul.addr %s189, 8
          %s191 = scalar_lea.vmem %s0, %s190
          // Predicated region
          $region29: #{refine_unit_pallas.1} parent=27 // pred_check
            _
          $region30: #{refine_unit_pallas.1} parent=27 // pred_check_branch
            %193 = sbr.rel (0) target = $region32
          $region31: #{refine_unit_pallas.1} parent=27 // pred_region
            // Predicated region
            $region33: #{refine_unit_pallas.1} parent=31 // pred_check
              _
            $region34: #{refine_unit_pallas.1} parent=31 // pred_check_branch
              %195 = sbr.rel (0) target = $region36
            $region35: #{refine_unit_pallas.1} parent=31 // pred_region
              loop: start=0, step=1, limit=1
              $region37: #{refine_unit_pallas.1} parent=35 // loop_pre_header
                _
              $region38: #{refine_unit_pallas.1} parent=35 // loop_header
                %s197 = sphi 0, %s201
                %p198 = scmp.ge.s32.totalorder %s197, 1
                %s202 = sphi %s191, %s191
                %s203 = sphi %s188, %s188
              $region39: #{refine_unit_pallas.1} parent=35 // loop_header_branch
                %200 = sbr.rel (%p198) target = $region43
              $region40: #{refine_unit_pallas.1} parent=35 // loop_body
                %v204 = vld [vmem:[%s202] sm:$0xff]
                %205 = vst [vmem:[%s203] sm:$0xff] %v204
                %v206 = vld [vmem:[%s202 + $0x8] sm:$0xff]
                %207 = vst [vmem:[%s203 + $0x8] sm:$0xff] %v206
                %v208 = vld [vmem:[%s202 + $0x10] sm:$0xff]
                %209 = vst [vmem:[%s203 + $0x10] sm:$0xff] %v208
                %v210 = vld [vmem:[%s202 + $0x18] sm:$0xff]
                %211 = vst [vmem:[%s203 + $0x18] sm:$0xff] %v210
                %v212 = vld [vmem:[%s202 + $0x20] sm:$0xff]
                %213 = vst [vmem:[%s203 + $0x20] sm:$0xff] %v212
                %v214 = vld [vmem:[%s202 + $0x28] sm:$0xff]
                %215 = vst [vmem:[%s203 + $0x28] sm:$0xff] %v214
                %v216 = vld [vmem:[%s202 + $0x30] sm:$0xff]
                %217 = vst [vmem:[%s203 + $0x30] sm:$0xff] %v216
                %v218 = vld [vmem:[%s202 + $0x70] sm:$0xff]
                %219 = vst [vmem:[%s203 + $0x38] sm:$0xff] %v218
                %v220 = vld [vmem:[%s202 + $0x78] sm:$0xff]
                %221 = vst [vmem:[%s203 + $0x40] sm:$0xff] %v220
                %v222 = vld [vmem:[%s202 + $0x80] sm:$0xff]
                %223 = vst [vmem:[%s203 + $0x48] sm:$0xff] %v222
                %v224 = vld [vmem:[%s202 + $0x88] sm:$0xff]
                %225 = vst [vmem:[%s203 + $0x50] sm:$0xff] %v224
                %v226 = vld [vmem:[%s202 + $0x90] sm:$0xff]
                %227 = vst [vmem:[%s203 + $0x58] sm:$0xff] %v226
                %v228 = vld [vmem:[%s202 + $0x98] sm:$0xff]
                %229 = vst [vmem:[%s203 + $0x60] sm:$0xff] %v228
                %v230 = vld [vmem:[%s202 + $0xa0] sm:$0xff]
                %231 = vst [vmem:[%s203 + $0x68] sm:$0xff] %v230
                %v232 = vld [vmem:[%s202 + $0xe0] sm:$0xff]
                %233 = vst [vmem:[%s203 + $0x70] sm:$0xff] %v232
                %v234 = vld [vmem:[%s202 + $0xe8] sm:$0xff]
                %235 = vst [vmem:[%s203 + $0x78] sm:$0xff] %v234
                %v236 = vld [vmem:[%s202 + $0xf0] sm:$0xff]
                %237 = vst [vmem:[%s203 + $0x80] sm:$0xff] %v236
                %v238 = vld [vmem:[%s202 + $0xf8] sm:$0xff]
                %239 = vst [vmem:[%s203 + $0x88] sm:$0xff] %v238
                %v240 = vld [vmem:[%s202 + $0x100] sm:$0xff]
                %241 = vst [vmem:[%s203 + $0x90] sm:$0xff] %v240
                %v242 = vld [vmem:[%s202 + $0x108] sm:$0xff]
                %243 = vst [vmem:[%s203 + $0x98] sm:$0xff] %v242
                %v244 = vld [vmem:[%s202 + $0x110] sm:$0xff]
                %245 = vst [vmem:[%s203 + $0xa0] sm:$0xff] %v244
                %v246 = vld [vmem:[%s202 + $0x150] sm:$0xff]
                %247 = vst [vmem:[%s203 + $0xa8] sm:$0xff] %v246
                %v248 = vld [vmem:[%s202 + $0x158] sm:$0xff]
                %249 = vst [vmem:[%s203 + $0xb0] sm:$0xff] %v248
                %v250 = vld [vmem:[%s202 + $0x160] sm:$0xff]
                %251 = vst [vmem:[%s203 + $0xb8] sm:$0xff] %v250
                %v252 = vld [vmem:[%s202 + $0x168] sm:$0xff]
                %253 = vst [vmem:[%s203 + $0xc0] sm:$0xff] %v252
                %v254 = vld [vmem:[%s202 + $0x170] sm:$0xff]
                %255 = vst [vmem:[%s203 + $0xc8] sm:$0xff] %v254
                %v256 = vld [vmem:[%s202 + $0x178] sm:$0xff]
                %257 = vst [vmem:[%s203 + $0xd0] sm:$0xff] %v256
                %v258 = vld [vmem:[%s202 + $0x180] sm:$0xff]
                %259 = vst [vmem:[%s203 + $0xd8] sm:$0xff] %v258
                %v260 = vld [vmem:[%s202 + $0x1c0] sm:$0xff]
                %261 = vst [vmem:[%s203 + $0xe0] sm:$0xff] %v260
                %v262 = vld [vmem:[%s202 + $0x1c8] sm:$0xff]
                %263 = vst [vmem:[%s203 + $0xe8] sm:$0xff] %v262
                %v264 = vld [vmem:[%s202 + $0x1d0] sm:$0xff]
                %265 = vst [vmem:[%s203 + $0xf0] sm:$0xff] %v264
                %v266 = vld [vmem:[%s202 + $0x1d8] sm:$0xff]
                %267 = vst [vmem:[%s203 + $0xf8] sm:$0xff] %v266
                %v268 = vld [vmem:[%s202 + $0x1e0] sm:$0xff]
                %269 = vst [vmem:[%s203 + $0x100] sm:$0xff] %v268
                %v270 = vld [vmem:[%s202 + $0x1e8] sm:$0xff]
                %271 = vst [vmem:[%s203 + $0x108] sm:$0xff] %v270
                %v272 = vld [vmem:[%s202 + $0x1f0] sm:$0xff]
                %273 = vst [vmem:[%s203 + $0x110] sm:$0xff] %v272
                %v274 = vld [vmem:[%s202 + $0x230] sm:$0xff]
                %275 = vst [vmem:[%s203 + $0x118] sm:$0xff] %v274
                %v276 = vld [vmem:[%s202 + $0x238] sm:$0xff]
                %277 = vst [vmem:[%s203 + $0x120] sm:$0xff] %v276
                %v278 = vld [vmem:[%s202 + $0x240] sm:$0xff]
                %279 = vst [vmem:[%s203 + $0x128] sm:$0xff] %v278
                %v280 = vld [vmem:[%s202 + $0x248] sm:$0xff]
                %281 = vst [vmem:[%s203 + $0x130] sm:$0xff] %v280
                %v282 = vld [vmem:[%s202 + $0x250] sm:$0xff]
                %283 = vst [vmem:[%s203 + $0x138] sm:$0xff] %v282
                %v284 = vld [vmem:[%s202 + $0x258] sm:$0xff]
                %285 = vst [vmem:[%s203 + $0x140] sm:$0xff] %v284
                %v286 = vld [vmem:[%s202 + $0x260] sm:$0xff]
                %287 = vst [vmem:[%s203 + $0x148] sm:$0xff] %v286
                %v288 = vld [vmem:[%s202 + $0x2a0] sm:$0xff]
                %289 = vst [vmem:[%s203 + $0x150] sm:$0xff] %v288
                %v290 = vld [vmem:[%s202 + $0x2a8] sm:$0xff]
                %291 = vst [vmem:[%s203 + $0x158] sm:$0xff] %v290
                %v292 = vld [vmem:[%s202 + $0x2b0] sm:$0xff]
                %293 = vst [vmem:[%s203 + $0x160] sm:$0xff] %v292
                %v294 = vld [vmem:[%s202 + $0x2b8] sm:$0xff]
                %295 = vst [vmem:[%s203 + $0x168] sm:$0xff] %v294
                %v296 = vld [vmem:[%s202 + $0x2c0] sm:$0xff]
                %297 = vst [vmem:[%s203 + $0x170] sm:$0xff] %v296
                %v298 = vld [vmem:[%s202 + $0x2c8] sm:$0xff]
                %299 = vst [vmem:[%s203 + $0x178] sm:$0xff] %v298
                %v300 = vld [vmem:[%s202 + $0x2d0] sm:$0xff]
                %301 = vst [vmem:[%s203 + $0x180] sm:$0xff] %v300
                %v302 = vld [vmem:[%s202 + $0x310] sm:$0xff]
                %303 = vst [vmem:[%s203 + $0x188] sm:$0xff] %v302
                %v304 = vld [vmem:[%s202 + $0x318] sm:$0xff]
                %305 = vst [vmem:[%s203 + $0x190] sm:$0xff] %v304
                %v306 = vld [vmem:[%s202 + $0x320] sm:$0xff]
                %307 = vst [vmem:[%s203 + $0x198] sm:$0xff] %v306
                %v308 = vld [vmem:[%s202 + $0x328] sm:$0xff]
                %309 = vst [vmem:[%s203 + $0x1a0] sm:$0xff] %v308
                %v310 = vld [vmem:[%s202 + $0x330] sm:$0xff]
                %311 = vst [vmem:[%s203 + $0x1a8] sm:$0xff] %v310
                %v312 = vld [vmem:[%s202 + $0x338] sm:$0xff]
                %313 = vst [vmem:[%s203 + $0x1b0] sm:$0xff] %v312
                %v314 = vld [vmem:[%s202 + $0x340] sm:$0xff]
                %315 = vst [vmem:[%s203 + $0x1b8] sm:$0xff] %v314
                %v316 = vld [vmem:[%s202 + $0x380] sm:$0xff]
                %317 = vst [vmem:[%s203 + $0x1c0] sm:$0xff] %v316
                %v318 = vld [vmem:[%s202 + $0x388] sm:$0xff]
                %319 = vst [vmem:[%s203 + $0x1c8] sm:$0xff] %v318
                %v320 = vld [vmem:[%s202 + $0x390] sm:$0xff]
                %321 = vst [vmem:[%s203 + $0x1d0] sm:$0xff] %v320
                %v322 = vld [vmem:[%s202 + $0x398] sm:$0xff]
                %323 = vst [vmem:[%s203 + $0x1d8] sm:$0xff] %v322
                %v324 = vld [vmem:[%s202 + $0x3a0] sm:$0xff]
                %325 = vst [vmem:[%s203 + $0x1e0] sm:$0xff] %v324
                %v326 = vld [vmem:[%s202 + $0x3a8] sm:$0xff]
                %327 = vst [vmem:[%s203 + $0x1e8] sm:$0xff] %v326
                %v328 = vld [vmem:[%s202 + $0x3b0] sm:$0xff]
                %329 = vst [vmem:[%s203 + $0x1f0] sm:$0xff] %v328
                %v330 = vld [vmem:[%s202 + $0x3f0] sm:$0xff]
                %331 = vst [vmem:[%s203 + $0x1f8] sm:$0xff] %v330
                %v332 = vld [vmem:[%s202 + $0x3f8] sm:$0xff]
                %333 = vst [vmem:[%s203 + $0x200] sm:$0xff] %v332
                %v334 = vld [vmem:[%s202 + $0x400] sm:$0xff]
                %335 = vst [vmem:[%s203 + $0x208] sm:$0xff] %v334
                %v336 = vld [vmem:[%s202 + $0x408] sm:$0xff]
                %337 = vst [vmem:[%s203 + $0x210] sm:$0xff] %v336
                %v338 = vld [vmem:[%s202 + $0x410] sm:$0xff]
                %339 = vst [vmem:[%s203 + $0x218] sm:$0xff] %v338
                %v340 = vld [vmem:[%s202 + $0x418] sm:$0xff]
                %341 = vst [vmem:[%s203 + $0x220] sm:$0xff] %v340
                %v342 = vld [vmem:[%s202 + $0x420] sm:$0xff]
                %343 = vst [vmem:[%s203 + $0x228] sm:$0xff] %v342
                %v344 = vld [vmem:[%s202 + $0x460] sm:$0xff]
                %345 = vst [vmem:[%s203 + $0x230] sm:$0xff] %v344
                %v346 = vld [vmem:[%s202 + $0x468] sm:$0xff]
                %347 = vst [vmem:[%s203 + $0x238] sm:$0xff] %v346
                %v348 = vld [vmem:[%s202 + $0x470] sm:$0xff]
                %349 = vst [vmem:[%s203 + $0x240] sm:$0xff] %v348
                %v350 = vld [vmem:[%s202 + $0x478] sm:$0xff]
                %351 = vst [vmem:[%s203 + $0x248] sm:$0xff] %v350
                %v352 = vld [vmem:[%s202 + $0x480] sm:$0xff]
                %353 = vst [vmem:[%s203 + $0x250] sm:$0xff] %v352
                %v354 = vld [vmem:[%s202 + $0x488] sm:$0xff]
                %355 = vst [vmem:[%s203 + $0x258] sm:$0xff] %v354
                %v356 = vld [vmem:[%s202 + $0x490] sm:$0xff]
                %357 = vst [vmem:[%s203 + $0x260] sm:$0xff] %v356
                %v358 = vld [vmem:[%s202 + $0x4d0] sm:$0xff]
                %359 = vst [vmem:[%s203 + $0x268] sm:$0xff] %v358
                %v360 = vld [vmem:[%s202 + $0x4d8] sm:$0xff]
                %361 = vst [vmem:[%s203 + $0x270] sm:$0xff] %v360
                %v362 = vld [vmem:[%s202 + $0x4e0] sm:$0xff]
                %363 = vst [vmem:[%s203 + $0x278] sm:$0xff] %v362
                %v364 = vld [vmem:[%s202 + $0x4e8] sm:$0xff]
                %365 = vst [vmem:[%s203 + $0x280] sm:$0xff] %v364
                %v366 = vld [vmem:[%s202 + $0x4f0] sm:$0xff]
                %367 = vst [vmem:[%s203 + $0x288] sm:$0xff] %v366
                %v368 = vld [vmem:[%s202 + $0x4f8] sm:$0xff]
                %369 = vst [vmem:[%s203 + $0x290] sm:$0xff] %v368
                %v370 = vld [vmem:[%s202 + $0x500] sm:$0xff]
                %371 = vst [vmem:[%s203 + $0x298] sm:$0xff] %v370
                %v372 = vld [vmem:[%s202 + $0x540] sm:$0xff]
                %373 = vst [vmem:[%s203 + $0x2a0] sm:$0xff] %v372
                %v374 = vld [vmem:[%s202 + $0x548] sm:$0xff]
                %375 = vst [vmem:[%s203 + $0x2a8] sm:$0xff] %v374
                %v376 = vld [vmem:[%s202 + $0x550] sm:$0xff]
                %377 = vst [vmem:[%s203 + $0x2b0] sm:$0xff] %v376
                %v378 = vld [vmem:[%s202 + $0x558] sm:$0xff]
                %379 = vst [vmem:[%s203 + $0x2b8] sm:$0xff] %v378
                %v380 = vld [vmem:[%s202 + $0x560] sm:$0xff]
                %381 = vst [vmem:[%s203 + $0x2c0] sm:$0xff] %v380
                %v382 = vld [vmem:[%s202 + $0x568] sm:$0xff]
                %383 = vst [vmem:[%s203 + $0x2c8] sm:$0xff] %v382
                %v384 = vld [vmem:[%s202 + $0x570] sm:$0xff]
                %385 = vst [vmem:[%s203 + $0x2d0] sm:$0xff] %v384
                %v386 = vld [vmem:[%s202 + $0x5b0] sm:$0xff]
                %387 = vst [vmem:[%s203 + $0x2d8] sm:$0xff] %v386
                %v388 = vld [vmem:[%s202 + $0x5b8] sm:$0xff]
                %389 = vst [vmem:[%s203 + $0x2e0] sm:$0xff] %v388
                %v390 = vld [vmem:[%s202 + $0x5c0] sm:$0xff]
                %391 = vst [vmem:[%s203 + $0x2e8] sm:$0xff] %v390
                %v392 = vld [vmem:[%s202 + $0x5c8] sm:$0xff]
                %393 = vst [vmem:[%s203 + $0x2f0] sm:$0xff] %v392
                %v394 = vld [vmem:[%s202 + $0x5d0] sm:$0xff]
                %395 = vst [vmem:[%s203 + $0x2f8] sm:$0xff] %v394
                %v396 = vld [vmem:[%s202 + $0x5d8] sm:$0xff]
                %397 = vst [vmem:[%s203 + $0x300] sm:$0xff] %v396
                %v398 = vld [vmem:[%s202 + $0x5e0] sm:$0xff]
                %399 = vst [vmem:[%s203 + $0x308] sm:$0xff] %v398
                %v400 = vld [vmem:[%s202 + $0x620] sm:$0xff]
                %401 = vst [vmem:[%s203 + $0x310] sm:$0xff] %v400
                %v402 = vld [vmem:[%s202 + $0x628] sm:$0xff]
                %403 = vst [vmem:[%s203 + $0x318] sm:$0xff] %v402
                %v404 = vld [vmem:[%s202 + $0x630] sm:$0xff]
                %405 = vst [vmem:[%s203 + $0x320] sm:$0xff] %v404
                %v406 = vld [vmem:[%s202 + $0x638] sm:$0xff]
                %407 = vst [vmem:[%s203 + $0x328] sm:$0xff] %v406
                %v408 = vld [vmem:[%s202 + $0x640] sm:$0xff]
                %409 = vst [vmem:[%s203 + $0x330] sm:$0xff] %v408
                %v410 = vld [vmem:[%s202 + $0x648] sm:$0xff]
                %411 = vst [vmem:[%s203 + $0x338] sm:$0xff] %v410
                %v412 = vld [vmem:[%s202 + $0x650] sm:$0xff]
                %413 = vst [vmem:[%s203 + $0x340] sm:$0xff] %v412
                %v414 = vld [vmem:[%s202 + $0x690] sm:$0xff]
                %415 = vst [vmem:[%s203 + $0x348] sm:$0xff] %v414
                %v416 = vld [vmem:[%s202 + $0x698] sm:$0xff]
                %417 = vst [vmem:[%s203 + $0x350] sm:$0xff] %v416
                %v418 = vld [vmem:[%s202 + $0x6a0] sm:$0xff]
                %419 = vst [vmem:[%s203 + $0x358] sm:$0xff] %v418
                %v420 = vld [vmem:[%s202 + $0x6a8] sm:$0xff]
                %421 = vst [vmem:[%s203 + $0x360] sm:$0xff] %v420
                %v422 = vld [vmem:[%s202 + $0x6b0] sm:$0xff]
                %423 = vst [vmem:[%s203 + $0x368] sm:$0xff] %v422
                %v424 = vld [vmem:[%s202 + $0x6b8] sm:$0xff]
                %425 = vst [vmem:[%s203 + $0x370] sm:$0xff] %v424
                %v426 = vld [vmem:[%s202 + $0x6c0] sm:$0xff]
                %427 = vst [vmem:[%s203 + $0x378] sm:$0xff] %v426
              $region41: #{refine_unit_pallas.1} parent=35 // loop_footer
                %s201 = sadd.s32 1, %s197
              $region42: #{refine_unit_pallas.1} parent=35 // loop_footer_branch
                %196 = sbr.rel target = $region38
              $region43: #{refine_unit_pallas.1} parent=35 // loop_exit
                _
            $region36: #{refine_unit_pallas.1} parent=31 // pred_fallthru
              _
            // Predicated region
            $region44: #{refine_unit_pallas.1} parent=31 // pred_check
              _
            $region45: #{refine_unit_pallas.1} parent=31 // pred_check_branch
              %429 = sbr.rel target = $region47
            $region46: #{refine_unit_pallas.1} parent=31 // pred_region
              _
            $region47: #{refine_unit_pallas.1} parent=31 // pred_fallthru
              _
          $region32: #{refine_unit_pallas.1} parent=27 // pred_fallthru
            _
          %430 = vnop
        $region28: #{refine_unit_pallas.1} parent=23 // pred_fallthru
          _
        // Predicated region
        $region48: #{refine_unit_pallas.1} parent=23 // pred_check
          %p431 = pneg %p57
        $region49: #{refine_unit_pallas.1} parent=23 // pred_check_branch
          %433 = sbr.rel (%p431) target = $region51
        $region50: #{refine_unit_pallas.1} parent=23 // pred_region
          %s434 = sand.u32 %s47, 1
          %s435 = sand.u32 %s47, 1
          %s436 = smul.addr %s435, 448
          %s437 = scalar_lea.vmem [#allocation3], %s436
          %s438 = smul.u32 7, %s11
          %s439 = smul.addr %s438, 8
          %s440 = scalar_lea.vmem %s1, %s439
          // Predicated region
          $region52: #{refine_unit_pallas.1} parent=50 // pred_check
            _
          $region53: #{refine_unit_pallas.1} parent=50 // pred_check_branch
            %442 = sbr.rel (0) target = $region55
          $region54: #{refine_unit_pallas.1} parent=50 // pred_region
            // Predicated region
            $region56: #{refine_unit_pallas.1} parent=54 // pred_check
              _
            $region57: #{refine_unit_pallas.1} parent=54 // pred_check_branch
              %444 = sbr.rel (0) target = $region59
            $region58: #{refine_unit_pallas.1} parent=54 // pred_region
              loop: start=0, step=1, limit=1
              $region60: #{refine_unit_pallas.1} parent=58 // loop_pre_header
                _
              $region61: #{refine_unit_pallas.1} parent=58 // loop_header
                %s446 = sphi 0, %s450
                %p447 = scmp.ge.s32.totalorder %s446, 1
                %s451 = sphi %s440, %s440
                %s452 = sphi %s437, %s437
              $region62: #{refine_unit_pallas.1} parent=58 // loop_header_branch
                %449 = sbr.rel (%p447) target = $region66
              $region63: #{refine_unit_pallas.1} parent=58 // loop_body
                %v453 = vld [vmem:[%s451] sm:$0xff]
                %454 = vst [vmem:[%s452] sm:$0xff] %v453
                %v455 = vld [vmem:[%s451 + $0x8] sm:$0xff]
                %456 = vst [vmem:[%s452 + $0x8] sm:$0xff] %v455
                %v457 = vld [vmem:[%s451 + $0x10] sm:$0xff]
                %458 = vst [vmem:[%s452 + $0x10] sm:$0xff] %v457
                %v459 = vld [vmem:[%s451 + $0x18] sm:$0xff]
                %460 = vst [vmem:[%s452 + $0x18] sm:$0xff] %v459
                %v461 = vld [vmem:[%s451 + $0x20] sm:$0xff]
                %462 = vst [vmem:[%s452 + $0x20] sm:$0xff] %v461
                %v463 = vld [vmem:[%s451 + $0x28] sm:$0xff]
                %464 = vst [vmem:[%s452 + $0x28] sm:$0xff] %v463
                %v465 = vld [vmem:[%s451 + $0x30] sm:$0xff]
                %466 = vst [vmem:[%s452 + $0x30] sm:$0xff] %v465
                %v467 = vld [vmem:[%s451 + $0x70] sm:$0xff]
                %468 = vst [vmem:[%s452 + $0x38] sm:$0xff] %v467
                %v469 = vld [vmem:[%s451 + $0x78] sm:$0xff]
                %470 = vst [vmem:[%s452 + $0x40] sm:$0xff] %v469
                %v471 = vld [vmem:[%s451 + $0x80] sm:$0xff]
                %472 = vst [vmem:[%s452 + $0x48] sm:$0xff] %v471
                %v473 = vld [vmem:[%s451 + $0x88] sm:$0xff]
                %474 = vst [vmem:[%s452 + $0x50] sm:$0xff] %v473
                %v475 = vld [vmem:[%s451 + $0x90] sm:$0xff]
                %476 = vst [vmem:[%s452 + $0x58] sm:$0xff] %v475
                %v477 = vld [vmem:[%s451 + $0x98] sm:$0xff]
                %478 = vst [vmem:[%s452 + $0x60] sm:$0xff] %v477
                %v479 = vld [vmem:[%s451 + $0xa0] sm:$0xff]
                %480 = vst [vmem:[%s452 + $0x68] sm:$0xff] %v479
                %v481 = vld [vmem:[%s451 + $0xe0] sm:$0xff]
                %482 = vst [vmem:[%s452 + $0x70] sm:$0xff] %v481
                %v483 = vld [vmem:[%s451 + $0xe8] sm:$0xff]
                %484 = vst [vmem:[%s452 + $0x78] sm:$0xff] %v483
                %v485 = vld [vmem:[%s451 + $0xf0] sm:$0xff]
                %486 = vst [vmem:[%s452 + $0x80] sm:$0xff] %v485
                %v487 = vld [vmem:[%s451 + $0xf8] sm:$0xff]
                %488 = vst [vmem:[%s452 + $0x88] sm:$0xff] %v487
                %v489 = vld [vmem:[%s451 + $0x100] sm:$0xff]
                %490 = vst [vmem:[%s452 + $0x90] sm:$0xff] %v489
                %v491 = vld [vmem:[%s451 + $0x108] sm:$0xff]
                %492 = vst [vmem:[%s452 + $0x98] sm:$0xff] %v491
                %v493 = vld [vmem:[%s451 + $0x110] sm:$0xff]
                %494 = vst [vmem:[%s452 + $0xa0] sm:$0xff] %v493
                %v495 = vld [vmem:[%s451 + $0x150] sm:$0xff]
                %496 = vst [vmem:[%s452 + $0xa8] sm:$0xff] %v495
                %v497 = vld [vmem:[%s451 + $0x158] sm:$0xff]
                %498 = vst [vmem:[%s452 + $0xb0] sm:$0xff] %v497
                %v499 = vld [vmem:[%s451 + $0x160] sm:$0xff]
                %500 = vst [vmem:[%s452 + $0xb8] sm:$0xff] %v499
                %v501 = vld [vmem:[%s451 + $0x168] sm:$0xff]
                %502 = vst [vmem:[%s452 + $0xc0] sm:$0xff] %v501
                %v503 = vld [vmem:[%s451 + $0x170] sm:$0xff]
                %504 = vst [vmem:[%s452 + $0xc8] sm:$0xff] %v503
                %v505 = vld [vmem:[%s451 + $0x178] sm:$0xff]
                %506 = vst [vmem:[%s452 + $0xd0] sm:$0xff] %v505
                %v507 = vld [vmem:[%s451 + $0x180] sm:$0xff]
                %508 = vst [vmem:[%s452 + $0xd8] sm:$0xff] %v507
                %v509 = vld [vmem:[%s451 + $0x1c0] sm:$0xff]
                %510 = vst [vmem:[%s452 + $0xe0] sm:$0xff] %v509
                %v511 = vld [vmem:[%s451 + $0x1c8] sm:$0xff]
                %512 = vst [vmem:[%s452 + $0xe8] sm:$0xff] %v511
                %v513 = vld [vmem:[%s451 + $0x1d0] sm:$0xff]
                %514 = vst [vmem:[%s452 + $0xf0] sm:$0xff] %v513
                %v515 = vld [vmem:[%s451 + $0x1d8] sm:$0xff]
                %516 = vst [vmem:[%s452 + $0xf8] sm:$0xff] %v515
                %v517 = vld [vmem:[%s451 + $0x1e0] sm:$0xff]
                %518 = vst [vmem:[%s452 + $0x100] sm:$0xff] %v517
                %v519 = vld [vmem:[%s451 + $0x1e8] sm:$0xff]
                %520 = vst [vmem:[%s452 + $0x108] sm:$0xff] %v519
                %v521 = vld [vmem:[%s451 + $0x1f0] sm:$0xff]
                %522 = vst [vmem:[%s452 + $0x110] sm:$0xff] %v521
                %v523 = vld [vmem:[%s451 + $0x230] sm:$0xff]
                %524 = vst [vmem:[%s452 + $0x118] sm:$0xff] %v523
                %v525 = vld [vmem:[%s451 + $0x238] sm:$0xff]
                %526 = vst [vmem:[%s452 + $0x120] sm:$0xff] %v525
                %v527 = vld [vmem:[%s451 + $0x240] sm:$0xff]
                %528 = vst [vmem:[%s452 + $0x128] sm:$0xff] %v527
                %v529 = vld [vmem:[%s451 + $0x248] sm:$0xff]
                %530 = vst [vmem:[%s452 + $0x130] sm:$0xff] %v529
                %v531 = vld [vmem:[%s451 + $0x250] sm:$0xff]
                %532 = vst [vmem:[%s452 + $0x138] sm:$0xff] %v531
                %v533 = vld [vmem:[%s451 + $0x258] sm:$0xff]
                %534 = vst [vmem:[%s452 + $0x140] sm:$0xff] %v533
                %v535 = vld [vmem:[%s451 + $0x260] sm:$0xff]
                %536 = vst [vmem:[%s452 + $0x148] sm:$0xff] %v535
                %v537 = vld [vmem:[%s451 + $0x2a0] sm:$0xff]
                %538 = vst [vmem:[%s452 + $0x150] sm:$0xff] %v537
                %v539 = vld [vmem:[%s451 + $0x2a8] sm:$0xff]
                %540 = vst [vmem:[%s452 + $0x158] sm:$0xff] %v539
                %v541 = vld [vmem:[%s451 + $0x2b0] sm:$0xff]
                %542 = vst [vmem:[%s452 + $0x160] sm:$0xff] %v541
                %v543 = vld [vmem:[%s451 + $0x2b8] sm:$0xff]
                %544 = vst [vmem:[%s452 + $0x168] sm:$0xff] %v543
                %v545 = vld [vmem:[%s451 + $0x2c0] sm:$0xff]
                %546 = vst [vmem:[%s452 + $0x170] sm:$0xff] %v545
                %v547 = vld [vmem:[%s451 + $0x2c8] sm:$0xff]
                %548 = vst [vmem:[%s452 + $0x178] sm:$0xff] %v547
                %v549 = vld [vmem:[%s451 + $0x2d0] sm:$0xff]
                %550 = vst [vmem:[%s452 + $0x180] sm:$0xff] %v549
                %v551 = vld [vmem:[%s451 + $0x310] sm:$0xff]
                %552 = vst [vmem:[%s452 + $0x188] sm:$0xff] %v551
                %v553 = vld [vmem:[%s451 + $0x318] sm:$0xff]
                %554 = vst [vmem:[%s452 + $0x190] sm:$0xff] %v553
                %v555 = vld [vmem:[%s451 + $0x320] sm:$0xff]
                %556 = vst [vmem:[%s452 + $0x198] sm:$0xff] %v555
                %v557 = vld [vmem:[%s451 + $0x328] sm:$0xff]
                %558 = vst [vmem:[%s452 + $0x1a0] sm:$0xff] %v557
                %v559 = vld [vmem:[%s451 + $0x330] sm:$0xff]
                %560 = vst [vmem:[%s452 + $0x1a8] sm:$0xff] %v559
                %v561 = vld [vmem:[%s451 + $0x338] sm:$0xff]
                %562 = vst [vmem:[%s452 + $0x1b0] sm:$0xff] %v561
                %v563 = vld [vmem:[%s451 + $0x340] sm:$0xff]
                %564 = vst [vmem:[%s452 + $0x1b8] sm:$0xff] %v563
              $region64: #{refine_unit_pallas.1} parent=58 // loop_footer
                %s450 = sadd.s32 1, %s446
              $region65: #{refine_unit_pallas.1} parent=58 // loop_footer_branch
                %445 = sbr.rel target = $region61
              $region66: #{refine_unit_pallas.1} parent=58 // loop_exit
                _
            $region59: #{refine_unit_pallas.1} parent=54 // pred_fallthru
              _
            // Predicated region
            $region67: #{refine_unit_pallas.1} parent=54 // pred_check
              _
            $region68: #{refine_unit_pallas.1} parent=54 // pred_check_branch
              %566 = sbr.rel target = $region70
            $region69: #{refine_unit_pallas.1} parent=54 // pred_region
              _
            $region70: #{refine_unit_pallas.1} parent=54 // pred_fallthru
              _
          $region55: #{refine_unit_pallas.1} parent=50 // pred_fallthru
            _
          %567 = vnop
        $region51: #{refine_unit_pallas.1} parent=23 // pred_fallthru
          _
        // Predicated region
        $region71: #{refine_unit_pallas.1} parent=23 // pred_check
          %p568 = pneg %p83
        $region72: #{refine_unit_pallas.1} parent=23 // pred_check_branch
          %570 = sbr.rel (%p568) target = $region74
        $region73: #{refine_unit_pallas.1} parent=23 // pred_region
          %s571 = smul.u32 7, %s11
          %p572 = scmp.lt.s32.totalorder %s571, 13
          %s573 = scalar_select %p572, %s571, 13
          %s574 = smul.addr %s573, 8
          %s575 = scalar_lea.vmem %s2, %s574
          %s576 = smul.u32 7, %s11
        $region74: #{refine_unit_pallas.1} parent=23 // pred_fallthru
          _
      $region24: #{refine_unit_pallas.1} parent=5 // pred_fallthru
        _
      %p577 = scmp.le.s32.totalorder 1, %s11
      %p578 = scmp.lt.s32.totalorder %s11, 3
      %p579 = pnand %p577, %p578
      %p580 = pneg %p579
      // Predicated region
      $region75: #{refine_unit_pallas.1} parent=5 // pred_check
        _
      $region76: #{refine_unit_pallas.1} parent=5 // pred_check_branch
        %582 = sbr.rel (%p579) target = $region78
      $region77: #{refine_unit_pallas.1} parent=5 // pred_region
        %s583 = ssub.s32 %s11, 1
        %s584 = sand.u32 %s24, 1
        %s585 = sand.u32 %s24, 1
        %s586 = smul.addr %s585, 896
        %s587 = scalar_lea.vmem [#allocation2], %s586
        // Predicated region
        $region79: #{refine_unit_pallas.1} parent=77 // pred_check
          %p588 = pneg %p37
        $region80: #{refine_unit_pallas.1} parent=77 // pred_check_branch
          %590 = sbr.rel (%p588) target = $region82
        $region81: #{refine_unit_pallas.1} parent=77 // pred_region
          _
        $region82: #{refine_unit_pallas.1} parent=77 // pred_fallthru
          _
        %s591 = sand.u32 %s50, 1
        %s592 = sand.u32 %s50, 1
        %s593 = smul.addr %s592, 448
        %s594 = scalar_lea.vmem [#allocation3], %s593
        // Predicated region
        $region83: #{refine_unit_pallas.1} parent=77 // pred_check
          %p595 = pneg %p63
        $region84: #{refine_unit_pallas.1} parent=77 // pred_check_branch
          %597 = sbr.rel (%p595) target = $region86
        $region85: #{refine_unit_pallas.1} parent=77 // pred_region
          _
        $region86: #{refine_unit_pallas.1} parent=77 // pred_fallthru
          _
        %s598 = sand.u32 %s24, 1
        %s599 = sand.u32 %s24, 1
        %s600 = smul.addr %s599, 896
        %s601 = scalar_lea.vmem [#allocation2], %s600
        %p602 = pneg %p37
        %p603 = pneg %p34
        %s604 = sand.u32 %s50, 1
        %s605 = sand.u32 %s50, 1
        %s606 = smul.addr %s605, 448
        %s607 = scalar_lea.vmem [#allocation3], %s606
        %p608 = pneg %p63
        %p609 = pneg %p60
        %s610 = smul.u32 7, %s16
        %p611 = scmp.lt.s32.totalorder %s610, 13
        %s612 = scalar_select %p611, %s610, 13
        %s613 = smul.addr %s612, 8
        %s614 = scalar_lea.vmem %s2, %s613
        %p615 = pneg %p89
        %p616 = pneg %p86
        %p617 = pneg %p110
        %p618 = pneg %p107
        %p619 = pneg %p131
        %p620 = pneg %p128
        %p621 = pneg %p157
        %p622 = pneg %p154
        %s623 = sand.u32 %s144, 1
        %s624 = sand.u32 %s144, 1
        %s625 = smul.addr %s624, 448
        %s626 = scalar_lea.vmem [#allocation4], %s625
        %s627 = smul.u32 7, %s16
        %s628 = smul.u32 7, %s16
        %s629 = smul.u32 7, %s16
        %p630 = scmp.lt.s32.totalorder %s629, 13
        %s631 = scalar_select %p630, %s629, 13
        %s632 = smul.addr %s631, 8
        %s633 = scalar_lea.vmem %s2, %s632
        %s634 = smul.u32 7, %s16
        %s635 = smul.u32 7, %s16
        %v636 = vld [vmem:[%s3] sm:$0xff]
        %v637 = vld [vmem:[%s3 + $0x8] sm:$0xff]
        %v638 = vld [vmem:[%s3 + $0x10] sm:$0xff]
        %v639 = vld [vmem:[%s3 + $0x18] sm:$0xff]
        %v640 = vld [vmem:[%s3 + $0x20] sm:$0xff]
        %v641 = vld [vmem:[%s3 + $0x28] sm:$0xff]
        %v642 = vld [vmem:[%s3 + $0x30] sm:$0xff]
        %v643 = vld [vmem:[%s3 + $0x38] sm:$0xff]
        %v644 = vld [vmem:[%s587] sm:$0xff]
        %v645 = vld [vmem:[%s587 + $0x8] sm:$0xff]
        %v646 = vld [vmem:[%s587 + $0x10] sm:$0xff]
        %v647 = vld [vmem:[%s587 + $0x18] sm:$0xff]
        %v648 = vld [vmem:[%s587 + $0x20] sm:$0xff]
        %v649 = vld [vmem:[%s587 + $0x28] sm:$0xff]
        %v650 = vld [vmem:[%s587 + $0x30] sm:$0xff]
        %v651 = vld [vmem:[%s587 + $0x38] sm:$0xff]
        %v652 = vld [vmem:[%s587 + $0x40] sm:$0xff]
        %v653 = vld [vmem:[%s587 + $0x48] sm:$0xff]
        %v654 = vld [vmem:[%s587 + $0x50] sm:$0xff]
        %v655 = vld [vmem:[%s587 + $0x58] sm:$0xff]
        %v656 = vld [vmem:[%s587 + $0x60] sm:$0xff]
        %v657 = vld [vmem:[%s587 + $0x68] sm:$0xff]
        %v658 = vld [vmem:[%s587 + $0x70] sm:$0xff]
        %v659 = vld [vmem:[%s587 + $0x78] sm:$0xff]
        %v660 = vld [vmem:[%s587 + $0x80] sm:$0xff]
        %v661 = vld [vmem:[%s587 + $0x88] sm:$0xff]
        %v662 = vld [vmem:[%s587 + $0x90] sm:$0xff]
        %v663 = vld [vmem:[%s587 + $0x98] sm:$0xff]
        %v664 = vld [vmem:[%s587 + $0xa0] sm:$0xff]
        %v665 = vld [vmem:[%s587 + $0xa8] sm:$0xff]
        %v666 = vld [vmem:[%s587 + $0xb0] sm:$0xff]
        %v667 = vld [vmem:[%s587 + $0xb8] sm:$0xff]
        %v668 = vld [vmem:[%s587 + $0xc0] sm:$0xff]
        %v669 = vld [vmem:[%s587 + $0xc8] sm:$0xff]
        %v670 = vld [vmem:[%s587 + $0xd0] sm:$0xff]
        %v671 = vld [vmem:[%s587 + $0xd8] sm:$0xff]
        %v672 = vld [vmem:[%s587 + $0xe0] sm:$0xff]
        %v673 = vld [vmem:[%s587 + $0xe8] sm:$0xff]
        %v674 = vld [vmem:[%s587 + $0xf0] sm:$0xff]
        %v675 = vld [vmem:[%s587 + $0xf8] sm:$0xff]
        %v676 = vld [vmem:[%s587 + $0x100] sm:$0xff]
        %v677 = vld [vmem:[%s587 + $0x108] sm:$0xff]
        %v678 = vld [vmem:[%s587 + $0x110] sm:$0xff]
        %v679 = vld [vmem:[%s587 + $0x118] sm:$0xff]
        %v680 = vld [vmem:[%s587 + $0x120] sm:$0xff]
        %v681 = vld [vmem:[%s587 + $0x128] sm:$0xff]
        %v682 = vld [vmem:[%s587 + $0x130] sm:$0xff]
        %v683 = vld [vmem:[%s587 + $0x138] sm:$0xff]
        %v684 = vld [vmem:[%s587 + $0x140] sm:$0xff]
        %v685 = vld [vmem:[%s587 + $0x148] sm:$0xff]
        %v686 = vld [vmem:[%s587 + $0x150] sm:$0xff]
        %v687 = vld [vmem:[%s587 + $0x158] sm:$0xff]
        %v688 = vld [vmem:[%s587 + $0x160] sm:$0xff]
        %v689 = vld [vmem:[%s587 + $0x168] sm:$0xff]
        %v690 = vld [vmem:[%s587 + $0x170] sm:$0xff]
        %v691 = vld [vmem:[%s587 + $0x178] sm:$0xff]
        %v692 = vld [vmem:[%s587 + $0x180] sm:$0xff]
        %v693 = vld [vmem:[%s587 + $0x188] sm:$0xff]
        %v694 = vld [vmem:[%s587 + $0x190] sm:$0xff]
        %v695 = vld [vmem:[%s587 + $0x198] sm:$0xff]
        %v696 = vld [vmem:[%s587 + $0x1a0] sm:$0xff]
        %v697 = vld [vmem:[%s587 + $0x1a8] sm:$0xff]
        %v698 = vld [vmem:[%s587 + $0x1b0] sm:$0xff]
        %v699 = vld [vmem:[%s587 + $0x1b8] sm:$0xff]
        %v700 = vld [vmem:[%s587 + $0x1c0] sm:$0xff]
        %v701 = vld [vmem:[%s587 + $0x1c8] sm:$0xff]
        %v702 = vld [vmem:[%s587 + $0x1d0] sm:$0xff]
        %v703 = vld [vmem:[%s587 + $0x1d8] sm:$0xff]
        %v704 = vld [vmem:[%s587 + $0x1e0] sm:$0xff]
        %v705 = vld [vmem:[%s587 + $0x1e8] sm:$0xff]
        %v706 = vld [vmem:[%s587 + $0x1f0] sm:$0xff]
        %v707 = vld [vmem:[%s587 + $0x1f8] sm:$0xff]
        %v708 = vld [vmem:[%s587 + $0x200] sm:$0xff]
        %v709 = vld [vmem:[%s587 + $0x208] sm:$0xff]
        %v710 = vld [vmem:[%s587 + $0x210] sm:$0xff]
        %v711 = vld [vmem:[%s587 + $0x218] sm:$0xff]
        %v712 = vld [vmem:[%s587 + $0x220] sm:$0xff]
        %v713 = vld [vmem:[%s587 + $0x228] sm:$0xff]
        %v714 = vld [vmem:[%s587 + $0x230] sm:$0xff]
        %v715 = vld [vmem:[%s587 + $0x238] sm:$0xff]
        %v716 = vld [vmem:[%s587 + $0x240] sm:$0xff]
        %v717 = vld [vmem:[%s587 + $0x248] sm:$0xff]
        %v718 = vld [vmem:[%s587 + $0x250] sm:$0xff]
        %v719 = vld [vmem:[%s587 + $0x258] sm:$0xff]
        %v720 = vld [vmem:[%s587 + $0x260] sm:$0xff]
        %v721 = vld [vmem:[%s587 + $0x268] sm:$0xff]
        %v722 = vld [vmem:[%s587 + $0x270] sm:$0xff]
        %v723 = vld [vmem:[%s587 + $0x278] sm:$0xff]
        %v724 = vld [vmem:[%s587 + $0x280] sm:$0xff]
        %v725 = vld [vmem:[%s587 + $0x288] sm:$0xff]
        %v726 = vld [vmem:[%s587 + $0x290] sm:$0xff]
        %v727 = vld [vmem:[%s587 + $0x298] sm:$0xff]
        %v728 = vld [vmem:[%s587 + $0x2a0] sm:$0xff]
        %v729 = vld [vmem:[%s587 + $0x2a8] sm:$0xff]
        %v730 = vld [vmem:[%s587 + $0x2b0] sm:$0xff]
        %v731 = vld [vmem:[%s587 + $0x2b8] sm:$0xff]
        %v732 = vld [vmem:[%s587 + $0x2c0] sm:$0xff]
        %v733 = vld [vmem:[%s587 + $0x2c8] sm:$0xff]
        %v734 = vld [vmem:[%s587 + $0x2d0] sm:$0xff]
        %v735 = vld [vmem:[%s587 + $0x2d8] sm:$0xff]
        %v736 = vld [vmem:[%s587 + $0x2e0] sm:$0xff]
        %v737 = vld [vmem:[%s587 + $0x2e8] sm:$0xff]
        %v738 = vld [vmem:[%s587 + $0x2f0] sm:$0xff]
        %v739 = vld [vmem:[%s587 + $0x2f8] sm:$0xff]
        %v740 = vld [vmem:[%s587 + $0x300] sm:$0xff]
        %v741 = vld [vmem:[%s587 + $0x308] sm:$0xff]
        %v742 = vld [vmem:[%s587 + $0x310] sm:$0xff]
        %v743 = vld [vmem:[%s587 + $0x318] sm:$0xff]
        %v744 = vld [vmem:[%s587 + $0x320] sm:$0xff]
        %v745 = vld [vmem:[%s587 + $0x328] sm:$0xff]
        %v746 = vld [vmem:[%s587 + $0x330] sm:$0xff]
        %v747 = vld [vmem:[%s587 + $0x338] sm:$0xff]
        %v748 = vld [vmem:[%s587 + $0x340] sm:$0xff]
        %v749 = vld [vmem:[%s587 + $0x348] sm:$0xff]
        %v750 = vld [vmem:[%s587 + $0x350] sm:$0xff]
        %v751 = vld [vmem:[%s587 + $0x358] sm:$0xff]
        %v752 = vld [vmem:[%s587 + $0x360] sm:$0xff]
        %v753 = vld [vmem:[%s587 + $0x368] sm:$0xff]
        %v754 = vld [vmem:[%s587 + $0x370] sm:$0xff]
        %v755 = vld [vmem:[%s587 + $0x378] sm:$0xff]
        %v756 = vld [vmem:[%s4] sm:$0xff]
        %v757 = vld [vmem:[%s4 + $0x8] sm:$0xff]
        %v758 = vld [vmem:[%s4 + $0x10] sm:$0xff]
        %v759 = vld [vmem:[%s4 + $0x18] sm:$0xff]
        %v760 = vld [vmem:[%s4 + $0x20] sm:$0xff]
        %v761 = vld [vmem:[%s4 + $0x28] sm:$0xff]
        %v762 = vld [vmem:[%s4 + $0x30] sm:$0xff]
        %v763 = vld [vmem:[%s4 + $0x38] sm:$0xff]
        %765 = vset.pattern.permute.xlu0 0
        %766 = vperm.xlu0 %765, %v756
        %v767 = vpop.permute.xlu0 %766
        %770 = vset.pattern.permute.xlu0 0
        %771 = vperm.xlu0 %770, %v757
        %v772 = vpop.permute.xlu0 %771
        %775 = vset.pattern.permute.xlu0 0
        %776 = vperm.xlu0 %775, %v758
        %v777 = vpop.permute.xlu0 %776
        %780 = vset.pattern.permute.xlu0 0
        %781 = vperm.xlu0 %780, %v759
        %v782 = vpop.permute.xlu0 %781
        %785 = vset.pattern.permute.xlu0 0
        %786 = vperm.xlu0 %785, %v760
        %v787 = vpop.permute.xlu0 %786
        %790 = vset.pattern.permute.xlu0 0
        %791 = vperm.xlu0 %790, %v761
        %v792 = vpop.permute.xlu0 %791
        %795 = vset.pattern.permute.xlu0 0
        %796 = vperm.xlu0 %795, %v762
        %v797 = vpop.permute.xlu0 %796
        %800 = vset.pattern.permute.xlu0 0
        %801 = vperm.xlu0 %800, %v763
        %v802 = vpop.permute.xlu0 %801
        %804 = vmatprep.subr.mxu0 %v645
        %805 = vmatpush1.msra.mxu0 %v644
        %806 = vmatprep.subr.mxu0 %v652
        %807 = vmatpush1.msra.mxu0 %v651
        %808 = vmatprep.subr.mxu0 %v659
        %809 = vmatpush1.msra.mxu0 %v658
        %810 = vmatprep.subr.mxu0 %v666
        %811 = vmatpush1.msra.mxu0 %v665
        %812 = vmatprep.subr.mxu0 %v673
        %813 = vmatpush1.msra.mxu0 %v672
        %814 = vmatprep.subr.mxu0 %v680
        %815 = vmatpush1.msra.mxu0 %v679
        %816 = vmatprep.subr.mxu0 %v687
        %817 = vmatpush1.msra.mxu0 %v686
        %818 = vmatprep.subr.mxu0 %v694
        %819 = vmatpush1.msra.mxu0 %v693
        %820 = vmatprep.subr.mxu0 %v701
        %821 = vmatpush1.msra.mxu0 %v700
        %822 = vmatprep.subr.mxu0 %v708
        %823 = vmatpush1.msra.mxu0 %v707
        %824 = vmatprep.subr.mxu0 %v715
        %825 = vmatpush1.msra.mxu0 %v714
        %826 = vmatprep.subr.mxu0 %v722
        %827 = vmatpush1.msra.mxu0 %v721
        %828 = vmatprep.subr.mxu0 %v729
        %829 = vmatpush1.msra.mxu0 %v728
        %830 = vmatprep.subr.mxu0 %v736
        %831 = vmatpush1.msra.mxu0 %v735
        %832 = vmatprep.subr.mxu0 %v743
        %833 = vmatpush1.msra.mxu0 %v742
        %834 = vmatprep.subr.mxu0 %v750
        %835 = vmatpush1.msra.mxu0 %v749
        %836 = vmatprep.subr.mxu0 0.0
        %837 = vmatpush1.msra.mxu0 0.0
        %838 = vmatprep.subr.mxu0 0.0
        %839 = vmatpush1.msra.mxu0 0.0
        %840 = vmatprep.subr.mxu0 0.0
        %841 = vmatpush1.msra.mxu0 0.0
        %842 = vmatprep.subr.mxu0 0.0
        %843 = vmatpush1.msra.mxu0 0.0
        %844 = vmatprep.subr.mxu0 0.0
        %845 = vmatpush1.msra.mxu0 0.0
        %846 = vmatprep.subr.mxu0 0.0
        %847 = vmatpush1.msra.mxu0 0.0
        %848 = vmatprep.subr.mxu0 0.0
        %849 = vmatpush1.msra.mxu0 0.0
        %850 = vmatprep.subr.mxu0 0.0
        %851 = vmatpush1.msra.mxu0 0.0
        %852 = vmatprep.subr.mxu0 0.0
        %853 = vmatpush1.msra.mxu0 0.0
        %854 = vmatprep.subr.mxu0 0.0
        %855 = vmatpush1.msra.mxu0 0.0
        %856 = vmatprep.subr.mxu0 0.0
        %857 = vmatpush1.msra.mxu0 0.0
        %858 = vmatprep.subr.mxu0 0.0
        %859 = vmatpush1.msra.mxu0 0.0
        %860 = vmatprep.subr.mxu0 0.0
        %861 = vmatpush1.msra.mxu0 0.0
        %862 = vmatprep.subr.mxu0 0.0
        %863 = vmatpush1.msra.mxu0 0.0
        %864 = vmatprep.subr.mxu0 0.0
        %865 = vmatpush1.msra.mxu0 0.0
        %866 = vmatprep.subr.mxu0 0.0
        %867 = vmatpush1.msra.mxu0 0.0
        %868 = vmatprep.mubr.f32.mxu0 0.0
        %869 = vmatmul.mubr.f32.gmra.mrb[0].mxu0 %v636
        %v870 = vpop.f32.mrb[0].mxu0
        %v871 = vadd.f32 %v767, %v870
        %v872 = vpop.f32.mrb[0].mxu0
        %v873 = vadd.f32 %v767, %v872
        %874 = vmatprep.mubr.f32.mxu0 0.0
        %875 = vmatmul.mubr.f32.gmra.mrb[0].mxu0 %v637
        %v876 = vpop.f32.mrb[0].mxu0
        %v877 = vadd.f32 %v772, %v876
        %v878 = vpop.f32.mrb[0].mxu0
        %v879 = vadd.f32 %v772, %v878
        %880 = vmatprep.mubr.f32.mxu0 0.0
        %881 = vmatmul.mubr.f32.gmra.mrb[0].mxu0 %v638
        %v882 = vpop.f32.mrb[0].mxu0
        %v883 = vadd.f32 %v777, %v882
        %v884 = vpop.f32.mrb[0].mxu0
        %v885 = vadd.f32 %v777, %v884
        %886 = vmatprep.mubr.f32.mxu0 0.0
        %887 = vmatmul.mubr.f32.gmra.mrb[0].mxu0 %v639
        %v888 = vpop.f32.mrb[0].mxu0
        %v889 = vadd.f32 %v782, %v888
        %v890 = vpop.f32.mrb[0].mxu0
        %v891 = vadd.f32 %v782, %v890
        %892 = vmatprep.mubr.f32.mxu0 0.0
        %893 = vmatmul.mubr.f32.gmra.mrb[0].mxu0 %v640
        %v894 = vpop.f32.mrb[0].mxu0
        %v895 = vadd.f32 %v787, %v894
        %v896 = vpop.f32.mrb[0].mxu0
        %v897 = vadd.f32 %v787, %v896
        %898 = vmatprep.mubr.f32.mxu0 0.0
        %899 = vmatmul.mubr.f32.gmra.mrb[0].mxu0 %v641
        %v900 = vpop.f32.mrb[0].mxu0
        %v901 = vadd.f32 %v792, %v900
        %v902 = vpop.f32.mrb[0].mxu0
        %v903 = vadd.f32 %v792, %v902
        %904 = vmatprep.mubr.f32.mxu0 0.0
        %905 = vmatmul.mubr.f32.gmra.mrb[0].mxu0 %v642
        %v906 = vpop.f32.mrb[0].mxu0
        %v907 = vadd.f32 %v797, %v906
        %v908 = vpop.f32.mrb[0].mxu0
        %v909 = vadd.f32 %v797, %v908
        %910 = vmatprep.mubr.f32.mxu0 0.0
        %911 = vmatmul.mubr.f32.gmra.mrb[0].mxu0 %v643
        %v912 = vpop.f32.mrb[0].mxu0
        %v913 = vadd.f32 %v802, %v912
        %v914 = vpop.f32.mrb[0].mxu0
        %v915 = vadd.f32 %v802, %v914
        %916 = vdwg.mxu0
        %917 = vmatprep.subr.mxu0 %v647
        %918 = vmatpush1.msra.mxu0 %v646
        %919 = vmatprep.subr.mxu0 %v654
        %920 = vmatpush1.msra.mxu0 %v653
        %921 = vmatprep.subr.mxu0 %v661
        %922 = vmatpush1.msra.mxu0 %v660
        %923 = vmatprep.subr.mxu0 %v668
        %924 = vmatpush1.msra.mxu0 %v667
        %925 = vmatprep.subr.mxu0 %v675
        %926 = vmatpush1.msra.mxu0 %v674
        %927 = vmatprep.subr.mxu0 %v682
        %928 = vmatpush1.msra.mxu0 %v681
        %929 = vmatprep.subr.mxu0 %v689
        %930 = vmatpush1.msra.mxu0 %v688
        %931 = vmatprep.subr.mxu0 %v696
        %932 = vmatpush1.msra.mxu0 %v695
        %933 = vmatprep.subr.mxu0 %v703
        %934 = vmatpush1.msra.mxu0 %v702
        %935 = vmatprep.subr.mxu0 %v710
        %936 = vmatpush1.msra.mxu0 %v709
        %937 = vmatprep.subr.mxu0 %v717
        %938 = vmatpush1.msra.mxu0 %v716
        %939 = vmatprep.subr.mxu0 %v724
        %940 = vmatpush1.msra.mxu0 %v723
        %941 = vmatprep.subr.mxu0 %v731
        %942 = vmatpush1.msra.mxu0 %v730
        %943 = vmatprep.subr.mxu0 %v738
        %944 = vmatpush1.msra.mxu0 %v737
        %945 = vmatprep.subr.mxu0 %v745
        %946 = vmatpush1.msra.mxu0 %v744
        %947 = vmatprep.subr.mxu0 %v752
        %948 = vmatpush1.msra.mxu0 %v751
        %949 = vmatprep.subr.mxu0 0.0
        %950 = vmatpush1.msra.mxu0 0.0
        %951 = vmatprep.subr.mxu0 0.0
        %952 = vmatpush1.msra.mxu0 0.0
        %953 = vmatprep.subr.mxu0 0.0
        %954 = vmatpush1.msra.mxu0 0.0
        %955 = vmatprep.subr.mxu0 0.0
        %956 = vmatpush1.msra.mxu0 0.0
        %957 = vmatprep.subr.mxu0 0.0
        %958 = vmatpush1.msra.mxu0 0.0
        %959 = vmatprep.subr.mxu0 0.0
        %960 = vmatpush1.msra.mxu0 0.0
        %961 = vmatprep.subr.mxu0 0.0
        %962 = vmatpush1.msra.mxu0 0.0
        %963 = vmatprep.subr.mxu0 0.0
        %964 = vmatpush1.msra.mxu0 0.0
        %965 = vmatprep.subr.mxu0 0.0
        %966 = vmatpush1.msra.mxu0 0.0
        %967 = vmatprep.subr.mxu0 0.0
        %968 = vmatpush1.msra.mxu0 0.0
        %969 = vmatprep.subr.mxu0 0.0
        %970 = vmatpush1.msra.mxu0 0.0
        %971 = vmatprep.subr.mxu0 0.0
        %972 = vmatpush1.msra.mxu0 0.0
        %973 = vmatprep.subr.mxu0 0.0
        %974 = vmatpush1.msra.mxu0 0.0
        %975 = vmatprep.subr.mxu0 0.0
        %976 = vmatpush1.msra.mxu0 0.0
        %977 = vmatprep.subr.mxu0 0.0
        %978 = vmatpush1.msra.mxu0 0.0
        %979 = vmatprep.subr.mxu0 0.0
        %980 = vmatpush1.msra.mxu0 0.0
        %981 = vmatprep.mubr.f32.mxu0 0.0
        %982 = vmatmul.mubr.f32.gmra.mrb[0].mxu0 %v636
        %v983 = vpop.f32.mrb[0].mxu0
        %v984 = vadd.f32 %v767, %v983
        %v985 = vpop.f32.mrb[0].mxu0
        %v986 = vadd.f32 %v767, %v985
        %987 = vmatprep.mubr.f32.mxu0 0.0
        %988 = vmatmul.mubr.f32.gmra.mrb[0].mxu0 %v637
        %v989 = vpop.f32.mrb[0].mxu0
        %v990 = vadd.f32 %v772, %v989
        %v991 = vpop.f32.mrb[0].mxu0
        %v992 = vadd.f32 %v772, %v991
        %993 = vmatprep.mubr.f32.mxu0 0.0
        %994 = vmatmul.mubr.f32.gmra.mrb[0].mxu0 %v638
        %v995 = vpop.f32.mrb[0].mxu0
        %v996 = vadd.f32 %v777, %v995
        %v997 = vpop.f32.mrb[0].mxu0
        %v998 = vadd.f32 %v777, %v997
        %999 = vmatprep.mubr.f32.mxu0 0.0
        %1000 = vmatmul.mubr.f32.gmra.mrb[0].mxu0 %v639
        %v1001 = vpop.f32.mrb[0].mxu0
        %v1002 = vadd.f32 %v782, %v1001
        %v1003 = vpop.f32.mrb[0].mxu0
        %v1004 = vadd.f32 %v782, %v1003
        %1005 = vmatprep.mubr.f32.mxu0 0.0
        %1006 = vmatmul.mubr.f32.gmra.mrb[0].mxu0 %v640
        %v1007 = vpop.f32.mrb[0].mxu0
        %v1008 = vadd.f32 %v787, %v1007
        %v1009 = vpop.f32.mrb[0].mxu0
        %v1010 = vadd.f32 %v787, %v1009
        %1011 = vmatprep.mubr.f32.mxu0 0.0
        %1012 = vmatmul.mubr.f32.gmra.mrb[0].mxu0 %v641
        %v1013 = vpop.f32.mrb[0].mxu0
        %v1014 = vadd.f32 %v792, %v1013
        %v1015 = vpop.f32.mrb[0].mxu0
        %v1016 = vadd.f32 %v792, %v1015
        %1017 = vmatprep.mubr.f32.mxu0 0.0
        %1018 = vmatmul.mubr.f32.gmra.mrb[0].mxu0 %v642
        %v1019 = vpop.f32.mrb[0].mxu0
        %v1020 = vadd.f32 %v797, %v1019
        %v1021 = vpop.f32.mrb[0].mxu0
        %v1022 = vadd.f32 %v797, %v1021
        %1023 = vmatprep.mubr.f32.mxu0 0.0
        %1024 = vmatmul.mubr.f32.gmra.mrb[0].mxu0 %v643
        %v1025 = vpop.f32.mrb[0].mxu0
        %v1026 = vadd.f32 %v802, %v1025
        %v1027 = vpop.f32.mrb[0].mxu0
        %v1028 = vadd.f32 %v802, %v1027
        %1029 = vdwg.mxu0
        %1030 = vmatprep.subr.mxu0 %v649
        %1031 = vmatpush1.msra.mxu0 %v648
        %1032 = vmatprep.subr.mxu0 %v656
        %1033 = vmatpush1.msra.mxu0 %v655
        %1034 = vmatprep.subr.mxu0 %v663
        %1035 = vmatpush1.msra.mxu0 %v662
        %1036 = vmatprep.subr.mxu0 %v670
        %1037 = vmatpush1.msra.mxu0 %v669
        %1038 = vmatprep.subr.mxu0 %v677
        %1039 = vmatpush1.msra.mxu0 %v676
        %1040 = vmatprep.subr.mxu0 %v684
        %1041 = vmatpush1.msra.mxu0 %v683
        %1042 = vmatprep.subr.mxu0 %v691
        %1043 = vmatpush1.msra.mxu0 %v690
        %1044 = vmatprep.subr.mxu0 %v698
        %1045 = vmatpush1.msra.mxu0 %v697
        %1046 = vmatprep.subr.mxu0 %v705
        %1047 = vmatpush1.msra.mxu0 %v704
        %1048 = vmatprep.subr.mxu0 %v712
        %1049 = vmatpush1.msra.mxu0 %v711
        %1050 = vmatprep.subr.mxu0 %v719
        %1051 = vmatpush1.msra.mxu0 %v718
        %1052 = vmatprep.subr.mxu0 %v726
        %1053 = vmatpush1.msra.mxu0 %v725
        %1054 = vmatprep.subr.mxu0 %v733
        %1055 = vmatpush1.msra.mxu0 %v732
        %1056 = vmatprep.subr.mxu0 %v740
        %1057 = vmatpush1.msra.mxu0 %v739
        %1058 = vmatprep.subr.mxu0 %v747
        %1059 = vmatpush1.msra.mxu0 %v746
        %1060 = vmatprep.subr.mxu0 %v754
        %1061 = vmatpush1.msra.mxu0 %v753
        %1062 = vmatprep.subr.mxu0 0.0
        %1063 = vmatpush1.msra.mxu0 0.0
        %1064 = vmatprep.subr.mxu0 0.0
        %1065 = vmatpush1.msra.mxu0 0.0
        %1066 = vmatprep.subr.mxu0 0.0
        %1067 = vmatpush1.msra.mxu0 0.0
        %1068 = vmatprep.subr.mxu0 0.0
        %1069 = vmatpush1.msra.mxu0 0.0
        %1070 = vmatprep.subr.mxu0 0.0
        %1071 = vmatpush1.msra.mxu0 0.0
        %1072 = vmatprep.subr.mxu0 0.0
        %1073 = vmatpush1.msra.mxu0 0.0
        %1074 = vmatprep.subr.mxu0 0.0
        %1075 = vmatpush1.msra.mxu0 0.0
        %1076 = vmatprep.subr.mxu0 0.0
        %1077 = vmatpush1.msra.mxu0 0.0
        %1078 = vmatprep.subr.mxu0 0.0
        %1079 = vmatpush1.msra.mxu0 0.0
        %1080 = vmatprep.subr.mxu0 0.0
        %1081 = vmatpush1.msra.mxu0 0.0
        %1082 = vmatprep.subr.mxu0 0.0
        %1083 = vmatpush1.msra.mxu0 0.0
        %1084 = vmatprep.subr.mxu0 0.0
        %1085 = vmatpush1.msra.mxu0 0.0
        %1086 = vmatprep.subr.mxu0 0.0
        %1087 = vmatpush1.msra.mxu0 0.0
        %1088 = vmatprep.subr.mxu0 0.0
        %1089 = vmatpush1.msra.mxu0 0.0
        %1090 = vmatprep.subr.mxu0 0.0
        %1091 = vmatpush1.msra.mxu0 0.0
        %1092 = vmatprep.subr.mxu0 0.0
        %1093 = vmatpush1.msra.mxu0 0.0
        %1094 = vmatprep.mubr.f32.mxu0 0.0
        %1095 = vmatmul.mubr.f32.gmra.mrb[0].mxu0 %v636
        %v1096 = vpop.f32.mrb[0].mxu0
        %v1097 = vadd.f32 %v767, %v1096
        %v1098 = vpop.f32.mrb[0].mxu0
        %v1099 = vadd.f32 %v767, %v1098
        %1100 = vmatprep.mubr.f32.mxu0 0.0
        %1101 = vmatmul.mubr.f32.gmra.mrb[0].mxu0 %v637
        %v1102 = vpop.f32.mrb[0].mxu0
        %v1103 = vadd.f32 %v772, %v1102
        %v1104 = vpop.f32.mrb[0].mxu0
        %v1105 = vadd.f32 %v772, %v1104
        %1106 = vmatprep.mubr.f32.mxu0 0.0
        %1107 = vmatmul.mubr.f32.gmra.mrb[0].mxu0 %v638
        %v1108 = vpop.f32.mrb[0].mxu0
        %v1109 = vadd.f32 %v777, %v1108
        %v1110 = vpop.f32.mrb[0].mxu0
        %v1111 = vadd.f32 %v777, %v1110
        %1112 = vmatprep.mubr.f32.mxu0 0.0
        %1113 = vmatmul.mubr.f32.gmra.mrb[0].mxu0 %v639
        %v1114 = vpop.f32.mrb[0].mxu0
        %v1115 = vadd.f32 %v782, %v1114
        %v1116 = vpop.f32.mrb[0].mxu0
        %v1117 = vadd.f32 %v782, %v1116
        %1118 = vmatprep.mubr.f32.mxu0 0.0
        %1119 = vmatmul.mubr.f32.gmra.mrb[0].mxu0 %v640
        %v1120 = vpop.f32.mrb[0].mxu0
        %v1121 = vadd.f32 %v787, %v1120
        %v1122 = vpop.f32.mrb[0].mxu0
        %v1123 = vadd.f32 %v787, %v1122
        %1124 = vmatprep.mubr.f32.mxu0 0.0
        %1125 = vmatmul.mubr.f32.gmra.mrb[0].mxu0 %v641
        %v1126 = vpop.f32.mrb[0].mxu0
        %v1127 = vadd.f32 %v792, %v1126
        %v1128 = vpop.f32.mrb[0].mxu0
        %v1129 = vadd.f32 %v792, %v1128
        %1130 = vmatprep.mubr.f32.mxu0 0.0
        %1131 = vmatmul.mubr.f32.gmra.mrb[0].mxu0 %v642
        %v1132 = vpop.f32.mrb[0].mxu0
        %v1133 = vadd.f32 %v797, %v1132
        %v1134 = vpop.f32.mrb[0].mxu0
        %v1135 = vadd.f32 %v797, %v1134
        %1136 = vmatprep.mubr.f32.mxu0 0.0
        %1137 = vmatmul.mubr.f32.gmra.mrb[0].mxu0 %v643
        %v1138 = vpop.f32.mrb[0].mxu0
        %v1139 = vadd.f32 %v802, %v1138
        %v1140 = vpop.f32.mrb[0].mxu0
        %v1141 = vadd.f32 %v802, %v1140
        %1142 = vdwg.mxu0
        %1143 = vmatprep.subr.mxu0 0.0
        %1144 = vmatpush1.msra.mxu0 %v650
        %1145 = vmatprep.subr.mxu0 0.0
        %1146 = vmatpush1.msra.mxu0 %v657
        %1147 = vmatprep.subr.mxu0 0.0
        %1148 = vmatpush1.msra.mxu0 %v664
        %1149 = vmatprep.subr.mxu0 0.0
        %1150 = vmatpush1.msra.mxu0 %v671
        %1151 = vmatprep.subr.mxu0 0.0
        %1152 = vmatpush1.msra.mxu0 %v678
        %1153 = vmatprep.subr.mxu0 0.0
        %1154 = vmatpush1.msra.mxu0 %v685
        %1155 = vmatprep.subr.mxu0 0.0
        %1156 = vmatpush1.msra.mxu0 %v692
        %1157 = vmatprep.subr.mxu0 0.0
        %1158 = vmatpush1.msra.mxu0 %v699
        %1159 = vmatprep.subr.mxu0 0.0
        %1160 = vmatpush1.msra.mxu0 %v706
        %1161 = vmatprep.subr.mxu0 0.0
        %1162 = vmatpush1.msra.mxu0 %v713
        %1163 = vmatprep.subr.mxu0 0.0
        %1164 = vmatpush1.msra.mxu0 %v720
        %1165 = vmatprep.subr.mxu0 0.0
        %1166 = vmatpush1.msra.mxu0 %v727
        %1167 = vmatprep.subr.mxu0 0.0
        %1168 = vmatpush1.msra.mxu0 %v734
        %1169 = vmatprep.subr.mxu0 0.0
        %1170 = vmatpush1.msra.mxu0 %v741
        %1171 = vmatprep.subr.mxu0 0.0
        %1172 = vmatpush1.msra.mxu0 %v748
        %1173 = vmatprep.subr.mxu0 0.0
        %1174 = vmatpush1.msra.mxu0 %v755
        %1175 = vmatprep.subr.mxu0 0.0
        %1176 = vmatpush1.msra.mxu0 0.0
        %1177 = vmatprep.subr.mxu0 0.0
        %1178 = vmatpush1.msra.mxu0 0.0
        %1179 = vmatprep.subr.mxu0 0.0
        %1180 = vmatpush1.msra.mxu0 0.0
        %1181 = vmatprep.subr.mxu0 0.0
        %1182 = vmatpush1.msra.mxu0 0.0
        %1183 = vmatprep.subr.mxu0 0.0
        %1184 = vmatpush1.msra.mxu0 0.0
        %1185 = vmatprep.subr.mxu0 0.0
        %1186 = vmatpush1.msra.mxu0 0.0
        %1187 = vmatprep.subr.mxu0 0.0
        %1188 = vmatpush1.msra.mxu0 0.0
        %1189 = vmatprep.subr.mxu0 0.0
        %1190 = vmatpush1.msra.mxu0 0.0
        %1191 = vmatprep.subr.mxu0 0.0
        %1192 = vmatpush1.msra.mxu0 0.0
        %1193 = vmatprep.subr.mxu0 0.0
        %1194 = vmatpush1.msra.mxu0 0.0
        %1195 = vmatprep.subr.mxu0 0.0
        %1196 = vmatpush1.msra.mxu0 0.0
        %1197 = vmatprep.subr.mxu0 0.0
        %1198 = vmatpush1.msra.mxu0 0.0
        %1199 = vmatprep.subr.mxu0 0.0
        %1200 = vmatpush1.msra.mxu0 0.0
        %1201 = vmatprep.subr.mxu0 0.0
        %1202 = vmatpush1.msra.mxu0 0.0
        %1203 = vmatprep.subr.mxu0 0.0
        %1204 = vmatpush1.msra.mxu0 0.0
        %1205 = vmatprep.subr.mxu0 0.0
        %1206 = vmatpush1.msra.mxu0 0.0
        %1207 = vmatprep.mubr.f32.mxu0 0.0
        %1208 = vmatmul.mubr.f32.gmra.mrb[0].mxu0 %v636
        %v1209 = vpop.f32.mrb[0].mxu0
        %v1210 = vadd.f32 %v767, %v1209
        %v1211 = vpop.f32.mrb[0].mxu0
        %1212 = vmatprep.mubr.f32.mxu0 0.0
        %1213 = vmatmul.mubr.f32.gmra.mrb[0].mxu0 %v637
        %v1214 = vpop.f32.mrb[0].mxu0
        %v1215 = vadd.f32 %v772, %v1214
        %v1216 = vpop.f32.mrb[0].mxu0
        %1217 = vmatprep.mubr.f32.mxu0 0.0
        %1218 = vmatmul.mubr.f32.gmra.mrb[0].mxu0 %v638
        %v1219 = vpop.f32.mrb[0].mxu0
        %v1220 = vadd.f32 %v777, %v1219
        %v1221 = vpop.f32.mrb[0].mxu0
        %1222 = vmatprep.mubr.f32.mxu0 0.0
        %1223 = vmatmul.mubr.f32.gmra.mrb[0].mxu0 %v639
        %v1224 = vpop.f32.mrb[0].mxu0
        %v1225 = vadd.f32 %v782, %v1224
        %v1226 = vpop.f32.mrb[0].mxu0
        %1227 = vmatprep.mubr.f32.mxu0 0.0
        %1228 = vmatmul.mubr.f32.gmra.mrb[0].mxu0 %v640
        %v1229 = vpop.f32.mrb[0].mxu0
        %v1230 = vadd.f32 %v787, %v1229
        %v1231 = vpop.f32.mrb[0].mxu0
        %1232 = vmatprep.mubr.f32.mxu0 0.0
        %1233 = vmatmul.mubr.f32.gmra.mrb[0].mxu0 %v641
        %v1234 = vpop.f32.mrb[0].mxu0
        %v1235 = vadd.f32 %v792, %v1234
        %v1236 = vpop.f32.mrb[0].mxu0
        %1237 = vmatprep.mubr.f32.mxu0 0.0
        %1238 = vmatmul.mubr.f32.gmra.mrb[0].mxu0 %v642
        %v1239 = vpop.f32.mrb[0].mxu0
        %v1240 = vadd.f32 %v797, %v1239
        %v1241 = vpop.f32.mrb[0].mxu0
        %1242 = vmatprep.mubr.f32.mxu0 0.0
        %1243 = vmatmul.mubr.f32.gmra.mrb[0].mxu0 %v643
        %v1244 = vpop.f32.mrb[0].mxu0
        %v1245 = vadd.f32 %v802, %v1244
        %v1246 = vpop.f32.mrb[0].mxu0
        %1247 = vdwg.mxu0
        %v1248 = vmax.f32 %v871, 0.0
        %v1249 = vmax.f32 %v873, 0.0
        %v1250 = vmax.f32 %v984, 0.0
        %v1251 = vmax.f32 %v986, 0.0
        %v1252 = vmax.f32 %v1097, 0.0
        %v1253 = vmax.f32 %v1099, 0.0
        %v1254 = vmax.f32 %v1210, 0.0
        %v1255 = vmax.f32 %v877, 0.0
        %v1256 = vmax.f32 %v879, 0.0
        %v1257 = vmax.f32 %v990, 0.0
        %v1258 = vmax.f32 %v992, 0.0
        %v1259 = vmax.f32 %v1103, 0.0
        %v1260 = vmax.f32 %v1105, 0.0
        %v1261 = vmax.f32 %v1215, 0.0
        %v1262 = vmax.f32 %v883, 0.0
        %v1263 = vmax.f32 %v885, 0.0
        %v1264 = vmax.f32 %v996, 0.0
        %v1265 = vmax.f32 %v998, 0.0
        %v1266 = vmax.f32 %v1109, 0.0
        %v1267 = vmax.f32 %v1111, 0.0
        %v1268 = vmax.f32 %v1220, 0.0
        %v1269 = vmax.f32 %v889, 0.0
        %v1270 = vmax.f32 %v891, 0.0
        %v1271 = vmax.f32 %v1002, 0.0
        %v1272 = vmax.f32 %v1004, 0.0
        %v1273 = vmax.f32 %v1115, 0.0
        %v1274 = vmax.f32 %v1117, 0.0
        %v1275 = vmax.f32 %v1225, 0.0
        %v1276 = vmax.f32 %v895, 0.0
        %v1277 = vmax.f32 %v897, 0.0
        %v1278 = vmax.f32 %v1008, 0.0
        %v1279 = vmax.f32 %v1010, 0.0
        %v1280 = vmax.f32 %v1121, 0.0
        %v1281 = vmax.f32 %v1123, 0.0
        %v1282 = vmax.f32 %v1230, 0.0
        %v1283 = vmax.f32 %v901, 0.0
        %v1284 = vmax.f32 %v903, 0.0
        %v1285 = vmax.f32 %v1014, 0.0
        %v1286 = vmax.f32 %v1016, 0.0
        %v1287 = vmax.f32 %v1127, 0.0
        %v1288 = vmax.f32 %v1129, 0.0
        %v1289 = vmax.f32 %v1235, 0.0
        %v1290 = vmax.f32 %v907, 0.0
        %v1291 = vmax.f32 %v909, 0.0
        %v1292 = vmax.f32 %v1020, 0.0
        %v1293 = vmax.f32 %v1022, 0.0
        %v1294 = vmax.f32 %v1133, 0.0
        %v1295 = vmax.f32 %v1135, 0.0
        %v1296 = vmax.f32 %v1240, 0.0
        %v1297 = vmax.f32 %v913, 0.0
        %v1298 = vmax.f32 %v915, 0.0
        %v1299 = vmax.f32 %v1026, 0.0
        %v1300 = vmax.f32 %v1028, 0.0
        %v1301 = vmax.f32 %v1139, 0.0
        %v1302 = vmax.f32 %v1141, 0.0
        %v1303 = vmax.f32 %v1245, 0.0
        %v1304 = vld [vmem:[%s633] sm:$0xff]
        %v1305 = vld [vmem:[%s633 + $0x8] sm:$0xff]
        %v1306 = vld [vmem:[%s633 + $0x10] sm:$0xff]
        %v1307 = vld [vmem:[%s633 + $0x18] sm:$0xff]
        %v1308 = vld [vmem:[%s633 + $0x20] sm:$0xff]
        %v1309 = vld [vmem:[%s633 + $0x28] sm:$0xff]
        %v1310 = vld [vmem:[%s633 + $0x30] sm:$0xff]
        %v1311 = vrot.slane %v1304, 4
        %v1312 = vadd.f32 %v1304, %v1311
        %v1313 = vrot.slane %v1312, 2
        %v1314 = vadd.f32 %v1312, %v1313
        %v1315 = vrot.slane %v1314, 1
        %v1316 = vadd.f32 %v1314, %v1315
        %v1317 = vrot.slane %v1305, 4
        %v1318 = vadd.f32 %v1305, %v1317
        %v1319 = vrot.slane %v1318, 2
        %v1320 = vadd.f32 %v1318, %v1319
        %v1321 = vrot.slane %v1320, 1
        %v1322 = vadd.f32 %v1320, %v1321
        %v1323 = vrot.slane %v1306, 4
        %v1324 = vadd.f32 %v1306, %v1323
        %v1325 = vrot.slane %v1324, 2
        %v1326 = vadd.f32 %v1324, %v1325
        %v1327 = vrot.slane %v1326, 1
        %v1328 = vadd.f32 %v1326, %v1327
        %v1329 = vrot.slane %v1307, 4
        %v1330 = vadd.f32 %v1307, %v1329
        %v1331 = vrot.slane %v1330, 2
        %v1332 = vadd.f32 %v1330, %v1331
        %v1333 = vrot.slane %v1332, 1
        %v1334 = vadd.f32 %v1332, %v1333
        %v1335 = vrot.slane %v1308, 4
        %v1336 = vadd.f32 %v1308, %v1335
        %v1337 = vrot.slane %v1336, 2
        %v1338 = vadd.f32 %v1336, %v1337
        %v1339 = vrot.slane %v1338, 1
        %v1340 = vadd.f32 %v1338, %v1339
        %v1341 = vrot.slane %v1309, 4
        %v1342 = vadd.f32 %v1309, %v1341
        %v1343 = vrot.slane %v1342, 2
        %v1344 = vadd.f32 %v1342, %v1343
        %v1345 = vrot.slane %v1344, 1
        %v1346 = vadd.f32 %v1344, %v1345
        %v1347 = vrot.slane %v1310, 4
        %v1348 = vadd.f32 %v1310, %v1347
        %v1349 = vrot.slane %v1348, 2
        %v1350 = vadd.f32 %v1348, %v1349
        %v1351 = vrot.slane %v1350, 1
        %v1352 = vadd.f32 %v1350, %v1351
        %v1353 = vmul.f32 %v1248, %v1316
        %v1354 = vmul.f32 %v1249, %v1322
        %v1355 = vmul.f32 %v1250, %v1328
        %v1356 = vmul.f32 %v1251, %v1334
        %v1357 = vmul.f32 %v1252, %v1340
        %v1358 = vmul.f32 %v1253, %v1346
        %v1359 = vmul.f32 %v1254, %v1352
        %v1360 = vmul.f32 %v1255, %v1316
        %v1361 = vmul.f32 %v1256, %v1322
        %v1362 = vmul.f32 %v1257, %v1328
        %v1363 = vmul.f32 %v1258, %v1334
        %v1364 = vmul.f32 %v1259, %v1340
        %v1365 = vmul.f32 %v1260, %v1346
        %v1366 = vmul.f32 %v1261, %v1352
        %v1367 = vmul.f32 %v1262, %v1316
        %v1368 = vmul.f32 %v1263, %v1322
        %v1369 = vmul.f32 %v1264, %v1328
        %v1370 = vmul.f32 %v1265, %v1334
        %v1371 = vmul.f32 %v1266, %v1340
        %v1372 = vmul.f32 %v1267, %v1346
        %v1373 = vmul.f32 %v1268, %v1352
        %v1374 = vmul.f32 %v1269, %v1316
        %v1375 = vmul.f32 %v1270, %v1322
        %v1376 = vmul.f32 %v1271, %v1328
        %v1377 = vmul.f32 %v1272, %v1334
        %v1378 = vmul.f32 %v1273, %v1340
        %v1379 = vmul.f32 %v1274, %v1346
        %v1380 = vmul.f32 %v1275, %v1352
        %v1381 = vmul.f32 %v1276, %v1316
        %v1382 = vmul.f32 %v1277, %v1322
        %v1383 = vmul.f32 %v1278, %v1328
        %v1384 = vmul.f32 %v1279, %v1334
        %v1385 = vmul.f32 %v1280, %v1340
        %v1386 = vmul.f32 %v1281, %v1346
        %v1387 = vmul.f32 %v1282, %v1352
        %v1388 = vmul.f32 %v1283, %v1316
        %v1389 = vmul.f32 %v1284, %v1322
        %v1390 = vmul.f32 %v1285, %v1328
        %v1391 = vmul.f32 %v1286, %v1334
        %v1392 = vmul.f32 %v1287, %v1340
        %v1393 = vmul.f32 %v1288, %v1346
        %v1394 = vmul.f32 %v1289, %v1352
        %v1395 = vmul.f32 %v1290, %v1316
        %v1396 = vmul.f32 %v1291, %v1322
        %v1397 = vmul.f32 %v1292, %v1328
        %v1398 = vmul.f32 %v1293, %v1334
        %v1399 = vmul.f32 %v1294, %v1340
        %v1400 = vmul.f32 %v1295, %v1346
        %v1401 = vmul.f32 %v1296, %v1352
        %v1402 = vmul.f32 %v1297, %v1316
        %v1403 = vmul.f32 %v1298, %v1322
        %v1404 = vmul.f32 %v1299, %v1328
        %v1405 = vmul.f32 %v1300, %v1334
        %v1406 = vmul.f32 %v1301, %v1340
        %v1407 = vmul.f32 %v1302, %v1346
        %v1408 = vmul.f32 %v1303, %v1352
        %v1409 = vld [vmem:[%s594] sm:$0xff]
        %v1410 = vld [vmem:[%s594 + $0x8] sm:$0xff]
        %v1411 = vld [vmem:[%s594 + $0x10] sm:$0xff]
        %v1412 = vld [vmem:[%s594 + $0x18] sm:$0xff]
        %v1413 = vld [vmem:[%s594 + $0x20] sm:$0xff]
        %v1414 = vld [vmem:[%s594 + $0x28] sm:$0xff]
        %v1415 = vld [vmem:[%s594 + $0x30] sm:$0xff]
        %v1416 = vld [vmem:[%s594 + $0x38] sm:$0xff]
        %v1417 = vld [vmem:[%s594 + $0x40] sm:$0xff]
        %v1418 = vld [vmem:[%s594 + $0x48] sm:$0xff]
        %v1419 = vld [vmem:[%s594 + $0x50] sm:$0xff]
        %v1420 = vld [vmem:[%s594 + $0x58] sm:$0xff]
        %v1421 = vld [vmem:[%s594 + $0x60] sm:$0xff]
        %v1422 = vld [vmem:[%s594 + $0x68] sm:$0xff]
        %v1423 = vld [vmem:[%s594 + $0x70] sm:$0xff]
        %v1424 = vld [vmem:[%s594 + $0x78] sm:$0xff]
        %v1425 = vld [vmem:[%s594 + $0x80] sm:$0xff]
        %v1426 = vld [vmem:[%s594 + $0x88] sm:$0xff]
        %v1427 = vld [vmem:[%s594 + $0x90] sm:$0xff]
        %v1428 = vld [vmem:[%s594 + $0x98] sm:$0xff]
        %v1429 = vld [vmem:[%s594 + $0xa0] sm:$0xff]
        %v1430 = vld [vmem:[%s594 + $0xa8] sm:$0xff]
        %v1431 = vld [vmem:[%s594 + $0xb0] sm:$0xff]
        %v1432 = vld [vmem:[%s594 + $0xb8] sm:$0xff]
        %v1433 = vld [vmem:[%s594 + $0xc0] sm:$0xff]
        %v1434 = vld [vmem:[%s594 + $0xc8] sm:$0xff]
        %v1435 = vld [vmem:[%s594 + $0xd0] sm:$0xff]
        %v1436 = vld [vmem:[%s594 + $0xd8] sm:$0xff]
        %v1437 = vld [vmem:[%s594 + $0xe0] sm:$0xff]
        %v1438 = vld [vmem:[%s594 + $0xe8] sm:$0xff]
        %v1439 = vld [vmem:[%s594 + $0xf0] sm:$0xff]
        %v1440 = vld [vmem:[%s594 + $0xf8] sm:$0xff]
        %v1441 = vld [vmem:[%s594 + $0x100] sm:$0xff]
        %v1442 = vld [vmem:[%s594 + $0x108] sm:$0xff]
        %v1443 = vld [vmem:[%s594 + $0x110] sm:$0xff]
        %v1444 = vld [vmem:[%s594 + $0x118] sm:$0xff]
        %v1445 = vld [vmem:[%s594 + $0x120] sm:$0xff]
        %v1446 = vld [vmem:[%s594 + $0x128] sm:$0xff]
        %v1447 = vld [vmem:[%s594 + $0x130] sm:$0xff]
        %v1448 = vld [vmem:[%s594 + $0x138] sm:$0xff]
        %v1449 = vld [vmem:[%s594 + $0x140] sm:$0xff]
        %v1450 = vld [vmem:[%s594 + $0x148] sm:$0xff]
        %v1451 = vld [vmem:[%s594 + $0x150] sm:$0xff]
        %v1452 = vld [vmem:[%s594 + $0x158] sm:$0xff]
        %v1453 = vld [vmem:[%s594 + $0x160] sm:$0xff]
        %v1454 = vld [vmem:[%s594 + $0x168] sm:$0xff]
        %v1455 = vld [vmem:[%s594 + $0x170] sm:$0xff]
        %v1456 = vld [vmem:[%s594 + $0x178] sm:$0xff]
        %v1457 = vld [vmem:[%s594 + $0x180] sm:$0xff]
        %v1458 = vld [vmem:[%s594 + $0x188] sm:$0xff]
        %v1459 = vld [vmem:[%s594 + $0x190] sm:$0xff]
        %v1460 = vld [vmem:[%s594 + $0x198] sm:$0xff]
        %v1461 = vld [vmem:[%s594 + $0x1a0] sm:$0xff]
        %v1462 = vld [vmem:[%s594 + $0x1a8] sm:$0xff]
        %v1463 = vld [vmem:[%s594 + $0x1b0] sm:$0xff]
        %v1464 = vld [vmem:[%s594 + $0x1b8] sm:$0xff]
        %v1465 = vadd.f32 %v1353, %v1409
        %v1466 = vadd.f32 %v1354, %v1410
        %v1467 = vadd.f32 %v1355, %v1411
        %v1468 = vadd.f32 %v1356, %v1412
        %v1469 = vadd.f32 %v1357, %v1413
        %v1470 = vadd.f32 %v1358, %v1414
        %v1471 = vadd.f32 %v1359, %v1415
        %v1472 = vadd.f32 %v1360, %v1416
        %v1473 = vadd.f32 %v1361, %v1417
        %v1474 = vadd.f32 %v1362, %v1418
        %v1475 = vadd.f32 %v1363, %v1419
        %v1476 = vadd.f32 %v1364, %v1420
        %v1477 = vadd.f32 %v1365, %v1421
        %v1478 = vadd.f32 %v1366, %v1422
        %v1479 = vadd.f32 %v1367, %v1423
        %v1480 = vadd.f32 %v1368, %v1424
        %v1481 = vadd.f32 %v1369, %v1425
        %v1482 = vadd.f32 %v1370, %v1426
        %v1483 = vadd.f32 %v1371, %v1427
        %v1484 = vadd.f32 %v1372, %v1428
        %v1485 = vadd.f32 %v1373, %v1429
        %v1486 = vadd.f32 %v1374, %v1430
        %v1487 = vadd.f32 %v1375, %v1431
        %v1488 = vadd.f32 %v1376, %v1432
        %v1489 = vadd.f32 %v1377, %v1433
        %v1490 = vadd.f32 %v1378, %v1434
        %v1491 = vadd.f32 %v1379, %v1435
        %v1492 = vadd.f32 %v1380, %v1436
        %v1493 = vadd.f32 %v1381, %v1437
        %v1494 = vadd.f32 %v1382, %v1438
        %v1495 = vadd.f32 %v1383, %v1439
        %v1496 = vadd.f32 %v1384, %v1440
        %v1497 = vadd.f32 %v1385, %v1441
        %v1498 = vadd.f32 %v1386, %v1442
        %v1499 = vadd.f32 %v1387, %v1443
        %v1500 = vadd.f32 %v1388, %v1444
        %v1501 = vadd.f32 %v1389, %v1445
        %v1502 = vadd.f32 %v1390, %v1446
        %v1503 = vadd.f32 %v1391, %v1447
        %v1504 = vadd.f32 %v1392, %v1448
        %v1505 = vadd.f32 %v1393, %v1449
        %v1506 = vadd.f32 %v1394, %v1450
        %v1507 = vadd.f32 %v1395, %v1451
        %v1508 = vadd.f32 %v1396, %v1452
        %v1509 = vadd.f32 %v1397, %v1453
        %v1510 = vadd.f32 %v1398, %v1454
        %v1511 = vadd.f32 %v1399, %v1455
        %v1512 = vadd.f32 %v1400, %v1456
        %v1513 = vadd.f32 %v1401, %v1457
        %v1514 = vadd.f32 %v1402, %v1458
        %v1515 = vadd.f32 %v1403, %v1459
        %v1516 = vadd.f32 %v1404, %v1460
        %v1517 = vadd.f32 %v1405, %v1461
        %v1518 = vadd.f32 %v1406, %v1462
        %v1519 = vadd.f32 %v1407, %v1463
        %v1520 = vadd.f32 %v1408, %v1464
        %1521 = vst [vmem:[%s626] sm:$0xff] %v1465
        %1522 = vst [vmem:[%s626 + $0x8] sm:$0xff] %v1466
        %1523 = vst [vmem:[%s626 + $0x10] sm:$0xff] %v1467
        %1524 = vst [vmem:[%s626 + $0x18] sm:$0xff] %v1468
        %1525 = vst [vmem:[%s626 + $0x20] sm:$0xff] %v1469
        %1526 = vst [vmem:[%s626 + $0x28] sm:$0xff] %v1470
        %1527 = vst [vmem:[%s626 + $0x30] sm:$0xff] %v1471
        %1528 = vst [vmem:[%s626 + $0x38] sm:$0xff] %v1472
        %1529 = vst [vmem:[%s626 + $0x40] sm:$0xff] %v1473
        %1530 = vst [vmem:[%s626 + $0x48] sm:$0xff] %v1474
        %1531 = vst [vmem:[%s626 + $0x50] sm:$0xff] %v1475
        %1532 = vst [vmem:[%s626 + $0x58] sm:$0xff] %v1476
        %1533 = vst [vmem:[%s626 + $0x60] sm:$0xff] %v1477
        %1534 = vst [vmem:[%s626 + $0x68] sm:$0xff] %v1478
        %1535 = vst [vmem:[%s626 + $0x70] sm:$0xff] %v1479
        %1536 = vst [vmem:[%s626 + $0x78] sm:$0xff] %v1480
        %1537 = vst [vmem:[%s626 + $0x80] sm:$0xff] %v1481
        %1538 = vst [vmem:[%s626 + $0x88] sm:$0xff] %v1482
        %1539 = vst [vmem:[%s626 + $0x90] sm:$0xff] %v1483
        %1540 = vst [vmem:[%s626 + $0x98] sm:$0xff] %v1484
        %1541 = vst [vmem:[%s626 + $0xa0] sm:$0xff] %v1485
        %1542 = vst [vmem:[%s626 + $0xa8] sm:$0xff] %v1486
        %1543 = vst [vmem:[%s626 + $0xb0] sm:$0xff] %v1487
        %1544 = vst [vmem:[%s626 + $0xb8] sm:$0xff] %v1488
        %1545 = vst [vmem:[%s626 + $0xc0] sm:$0xff] %v1489
        %1546 = vst [vmem:[%s626 + $0xc8] sm:$0xff] %v1490
        %1547 = vst [vmem:[%s626 + $0xd0] sm:$0xff] %v1491
        %1548 = vst [vmem:[%s626 + $0xd8] sm:$0xff] %v1492
        %1549 = vst [vmem:[%s626 + $0xe0] sm:$0xff] %v1493
        %1550 = vst [vmem:[%s626 + $0xe8] sm:$0xff] %v1494
        %1551 = vst [vmem:[%s626 + $0xf0] sm:$0xff] %v1495
        %1552 = vst [vmem:[%s626 + $0xf8] sm:$0xff] %v1496
        %1553 = vst [vmem:[%s626 + $0x100] sm:$0xff] %v1497
        %1554 = vst [vmem:[%s626 + $0x108] sm:$0xff] %v1498
        %1555 = vst [vmem:[%s626 + $0x110] sm:$0xff] %v1499
        %1556 = vst [vmem:[%s626 + $0x118] sm:$0xff] %v1500
        %1557 = vst [vmem:[%s626 + $0x120] sm:$0xff] %v1501
        %1558 = vst [vmem:[%s626 + $0x128] sm:$0xff] %v1502
        %1559 = vst [vmem:[%s626 + $0x130] sm:$0xff] %v1503
        %1560 = vst [vmem:[%s626 + $0x138] sm:$0xff] %v1504
        %1561 = vst [vmem:[%s626 + $0x140] sm:$0xff] %v1505
        %1562 = vst [vmem:[%s626 + $0x148] sm:$0xff] %v1506
        %1563 = vst [vmem:[%s626 + $0x150] sm:$0xff] %v1507
        %1564 = vst [vmem:[%s626 + $0x158] sm:$0xff] %v1508
        %1565 = vst [vmem:[%s626 + $0x160] sm:$0xff] %v1509
        %1566 = vst [vmem:[%s626 + $0x168] sm:$0xff] %v1510
        %1567 = vst [vmem:[%s626 + $0x170] sm:$0xff] %v1511
        %1568 = vst [vmem:[%s626 + $0x178] sm:$0xff] %v1512
        %1569 = vst [vmem:[%s626 + $0x180] sm:$0xff] %v1513
        %1570 = vst [vmem:[%s626 + $0x188] sm:$0xff] %v1514
        %1571 = vst [vmem:[%s626 + $0x190] sm:$0xff] %v1515
        %1572 = vst [vmem:[%s626 + $0x198] sm:$0xff] %v1516
        %1573 = vst [vmem:[%s626 + $0x1a0] sm:$0xff] %v1517
        %1574 = vst [vmem:[%s626 + $0x1a8] sm:$0xff] %v1518
        %1575 = vst [vmem:[%s626 + $0x1b0] sm:$0xff] %v1519
        %1576 = vst [vmem:[%s626 + $0x1b8] sm:$0xff] %v1520
        %s1577 = sand.u32 %s144, 1
        %s1578 = sand.u32 %s144, 1
        %s1579 = smul.addr %s1578, 448
        %s1580 = scalar_lea.vmem [#allocation4], %s1579
        // Predicated region
        $region87: #{refine_unit_pallas.1} parent=77 // pred_check
          %p1581 = pneg %p154
        $region88: #{refine_unit_pallas.1} parent=77 // pred_check_branch
          %1583 = sbr.rel (%p1581) target = $region90
        $region89: #{refine_unit_pallas.1} parent=77 // pred_region
          %s1584 = smul.u32 7, %s16
          %s1585 = smul.addr %s1584, 8
          %s1586 = scalar_lea.vmem %s5, %s1585
          // Predicated region
          $region91: #{refine_unit_pallas.1} parent=89 // pred_check
            _
          $region92: #{refine_unit_pallas.1} parent=89 // pred_check_branch
            %1588 = sbr.rel (0) target = $region94
          $region93: #{refine_unit_pallas.1} parent=89 // pred_region
            // Predicated region
            $region95: #{refine_unit_pallas.1} parent=93 // pred_check
              _
            $region96: #{refine_unit_pallas.1} parent=93 // pred_check_branch
              %1590 = sbr.rel (0) target = $region98
            $region97: #{refine_unit_pallas.1} parent=93 // pred_region
              loop: start=0, step=1, limit=1
              $region99: #{refine_unit_pallas.1} parent=97 // loop_pre_header
                _
              $region100: #{refine_unit_pallas.1} parent=97 // loop_header
                %s1592 = sphi 0, %s1596
                %p1593 = scmp.ge.s32.totalorder %s1592, 1
                %s1597 = sphi %s1580, %s1580
                %s1598 = sphi %s1586, %s1586
              $region101: #{refine_unit_pallas.1} parent=97 // loop_header_branch
                %1595 = sbr.rel (%p1593) target = $region105
              $region102: #{refine_unit_pallas.1} parent=97 // loop_body
                %v1599 = vld [vmem:[%s1597] sm:$0xff]
                %1600 = vst [vmem:[%s1598] sm:$0xff] %v1599
                %v1601 = vld [vmem:[%s1597 + $0x8] sm:$0xff]
                %1602 = vst [vmem:[%s1598 + $0x8] sm:$0xff] %v1601
                %v1603 = vld [vmem:[%s1597 + $0x10] sm:$0xff]
                %1604 = vst [vmem:[%s1598 + $0x10] sm:$0xff] %v1603
                %v1605 = vld [vmem:[%s1597 + $0x18] sm:$0xff]
                %1606 = vst [vmem:[%s1598 + $0x18] sm:$0xff] %v1605
                %v1607 = vld [vmem:[%s1597 + $0x20] sm:$0xff]
                %1608 = vst [vmem:[%s1598 + $0x20] sm:$0xff] %v1607
                %v1609 = vld [vmem:[%s1597 + $0x28] sm:$0xff]
                %1610 = vst [vmem:[%s1598 + $0x28] sm:$0xff] %v1609
                %v1611 = vld [vmem:[%s1597 + $0x30] sm:$0xff]
                %1612 = vst [vmem:[%s1598 + $0x30] sm:$0xff] %v1611
                %v1613 = vld [vmem:[%s1597 + $0x38] sm:$0xff]
                %1614 = vst [vmem:[%s1598 + $0x70] sm:$0xff] %v1613
                %v1615 = vld [vmem:[%s1597 + $0x40] sm:$0xff]
                %1616 = vst [vmem:[%s1598 + $0x78] sm:$0xff] %v1615
                %v1617 = vld [vmem:[%s1597 + $0x48] sm:$0xff]
                %1618 = vst [vmem:[%s1598 + $0x80] sm:$0xff] %v1617
                %v1619 = vld [vmem:[%s1597 + $0x50] sm:$0xff]
                %1620 = vst [vmem:[%s1598 + $0x88] sm:$0xff] %v1619
                %v1621 = vld [vmem:[%s1597 + $0x58] sm:$0xff]
                %1622 = vst [vmem:[%s1598 + $0x90] sm:$0xff] %v1621
                %v1623 = vld [vmem:[%s1597 + $0x60] sm:$0xff]
                %1624 = vst [vmem:[%s1598 + $0x98] sm:$0xff] %v1623
                %v1625 = vld [vmem:[%s1597 + $0x68] sm:$0xff]
                %1626 = vst [vmem:[%s1598 + $0xa0] sm:$0xff] %v1625
                %v1627 = vld [vmem:[%s1597 + $0x70] sm:$0xff]
                %1628 = vst [vmem:[%s1598 + $0xe0] sm:$0xff] %v1627
                %v1629 = vld [vmem:[%s1597 + $0x78] sm:$0xff]
                %1630 = vst [vmem:[%s1598 + $0xe8] sm:$0xff] %v1629
                %v1631 = vld [vmem:[%s1597 + $0x80] sm:$0xff]
                %1632 = vst [vmem:[%s1598 + $0xf0] sm:$0xff] %v1631
                %v1633 = vld [vmem:[%s1597 + $0x88] sm:$0xff]
                %1634 = vst [vmem:[%s1598 + $0xf8] sm:$0xff] %v1633
                %v1635 = vld [vmem:[%s1597 + $0x90] sm:$0xff]
                %1636 = vst [vmem:[%s1598 + $0x100] sm:$0xff] %v1635
                %v1637 = vld [vmem:[%s1597 + $0x98] sm:$0xff]
                %1638 = vst [vmem:[%s1598 + $0x108] sm:$0xff] %v1637
                %v1639 = vld [vmem:[%s1597 + $0xa0] sm:$0xff]
                %1640 = vst [vmem:[%s1598 + $0x110] sm:$0xff] %v1639
                %v1641 = vld [vmem:[%s1597 + $0xa8] sm:$0xff]
                %1642 = vst [vmem:[%s1598 + $0x150] sm:$0xff] %v1641
                %v1643 = vld [vmem:[%s1597 + $0xb0] sm:$0xff]
                %1644 = vst [vmem:[%s1598 + $0x158] sm:$0xff] %v1643
                %v1645 = vld [vmem:[%s1597 + $0xb8] sm:$0xff]
                %1646 = vst [vmem:[%s1598 + $0x160] sm:$0xff] %v1645
                %v1647 = vld [vmem:[%s1597 + $0xc0] sm:$0xff]
                %1648 = vst [vmem:[%s1598 + $0x168] sm:$0xff] %v1647
                %v1649 = vld [vmem:[%s1597 + $0xc8] sm:$0xff]
                %1650 = vst [vmem:[%s1598 + $0x170] sm:$0xff] %v1649
                %v1651 = vld [vmem:[%s1597 + $0xd0] sm:$0xff]
                %1652 = vst [vmem:[%s1598 + $0x178] sm:$0xff] %v1651
                %v1653 = vld [vmem:[%s1597 + $0xd8] sm:$0xff]
                %1654 = vst [vmem:[%s1598 + $0x180] sm:$0xff] %v1653
                %v1655 = vld [vmem:[%s1597 + $0xe0] sm:$0xff]
                %1656 = vst [vmem:[%s1598 + $0x1c0] sm:$0xff] %v1655
                %v1657 = vld [vmem:[%s1597 + $0xe8] sm:$0xff]
                %1658 = vst [vmem:[%s1598 + $0x1c8] sm:$0xff] %v1657
                %v1659 = vld [vmem:[%s1597 + $0xf0] sm:$0xff]
                %1660 = vst [vmem:[%s1598 + $0x1d0] sm:$0xff] %v1659
                %v1661 = vld [vmem:[%s1597 + $0xf8] sm:$0xff]
                %1662 = vst [vmem:[%s1598 + $0x1d8] sm:$0xff] %v1661
                %v1663 = vld [vmem:[%s1597 + $0x100] sm:$0xff]
                %1664 = vst [vmem:[%s1598 + $0x1e0] sm:$0xff] %v1663
                %v1665 = vld [vmem:[%s1597 + $0x108] sm:$0xff]
                %1666 = vst [vmem:[%s1598 + $0x1e8] sm:$0xff] %v1665
                %v1667 = vld [vmem:[%s1597 + $0x110] sm:$0xff]
                %1668 = vst [vmem:[%s1598 + $0x1f0] sm:$0xff] %v1667
                %v1669 = vld [vmem:[%s1597 + $0x118] sm:$0xff]
                %1670 = vst [vmem:[%s1598 + $0x230] sm:$0xff] %v1669
                %v1671 = vld [vmem:[%s1597 + $0x120] sm:$0xff]
                %1672 = vst [vmem:[%s1598 + $0x238] sm:$0xff] %v1671
                %v1673 = vld [vmem:[%s1597 + $0x128] sm:$0xff]
                %1674 = vst [vmem:[%s1598 + $0x240] sm:$0xff] %v1673
                %v1675 = vld [vmem:[%s1597 + $0x130] sm:$0xff]
                %1676 = vst [vmem:[%s1598 + $0x248] sm:$0xff] %v1675
                %v1677 = vld [vmem:[%s1597 + $0x138] sm:$0xff]
                %1678 = vst [vmem:[%s1598 + $0x250] sm:$0xff] %v1677
                %v1679 = vld [vmem:[%s1597 + $0x140] sm:$0xff]
                %1680 = vst [vmem:[%s1598 + $0x258] sm:$0xff] %v1679
                %v1681 = vld [vmem:[%s1597 + $0x148] sm:$0xff]
                %1682 = vst [vmem:[%s1598 + $0x260] sm:$0xff] %v1681
                %v1683 = vld [vmem:[%s1597 + $0x150] sm:$0xff]
                %1684 = vst [vmem:[%s1598 + $0x2a0] sm:$0xff] %v1683
                %v1685 = vld [vmem:[%s1597 + $0x158] sm:$0xff]
                %1686 = vst [vmem:[%s1598 + $0x2a8] sm:$0xff] %v1685
                %v1687 = vld [vmem:[%s1597 + $0x160] sm:$0xff]
                %1688 = vst [vmem:[%s1598 + $0x2b0] sm:$0xff] %v1687
                %v1689 = vld [vmem:[%s1597 + $0x168] sm:$0xff]
                %1690 = vst [vmem:[%s1598 + $0x2b8] sm:$0xff] %v1689
                %v1691 = vld [vmem:[%s1597 + $0x170] sm:$0xff]
                %1692 = vst [vmem:[%s1598 + $0x2c0] sm:$0xff] %v1691
                %v1693 = vld [vmem:[%s1597 + $0x178] sm:$0xff]
                %1694 = vst [vmem:[%s1598 + $0x2c8] sm:$0xff] %v1693
                %v1695 = vld [vmem:[%s1597 + $0x180] sm:$0xff]
                %1696 = vst [vmem:[%s1598 + $0x2d0] sm:$0xff] %v1695
                %v1697 = vld [vmem:[%s1597 + $0x188] sm:$0xff]
                %1698 = vst [vmem:[%s1598 + $0x310] sm:$0xff] %v1697
                %v1699 = vld [vmem:[%s1597 + $0x190] sm:$0xff]
                %1700 = vst [vmem:[%s1598 + $0x318] sm:$0xff] %v1699
                %v1701 = vld [vmem:[%s1597 + $0x198] sm:$0xff]
                %1702 = vst [vmem:[%s1598 + $0x320] sm:$0xff] %v1701
                %v1703 = vld [vmem:[%s1597 + $0x1a0] sm:$0xff]
                %1704 = vst [vmem:[%s1598 + $0x328] sm:$0xff] %v1703
                %v1705 = vld [vmem:[%s1597 + $0x1a8] sm:$0xff]
                %1706 = vst [vmem:[%s1598 + $0x330] sm:$0xff] %v1705
                %v1707 = vld [vmem:[%s1597 + $0x1b0] sm:$0xff]
                %1708 = vst [vmem:[%s1598 + $0x338] sm:$0xff] %v1707
                %v1709 = vld [vmem:[%s1597 + $0x1b8] sm:$0xff]
                %1710 = vst [vmem:[%s1598 + $0x340] sm:$0xff] %v1709
              $region103: #{refine_unit_pallas.1} parent=97 // loop_footer
                %s1596 = sadd.s32 1, %s1592
              $region104: #{refine_unit_pallas.1} parent=97 // loop_footer_branch
                %1591 = sbr.rel target = $region100
              $region105: #{refine_unit_pallas.1} parent=97 // loop_exit
                _
            $region98: #{refine_unit_pallas.1} parent=93 // pred_fallthru
              _
            // Predicated region
            $region106: #{refine_unit_pallas.1} parent=93 // pred_check
              _
            $region107: #{refine_unit_pallas.1} parent=93 // pred_check_branch
              %1712 = sbr.rel target = $region109
            $region108: #{refine_unit_pallas.1} parent=93 // pred_region
              _
            $region109: #{refine_unit_pallas.1} parent=93 // pred_fallthru
              _
          $region94: #{refine_unit_pallas.1} parent=89 // pred_fallthru
            _
          %1713 = vnop
        $region90: #{refine_unit_pallas.1} parent=77 // pred_fallthru
          _
      $region78: #{refine_unit_pallas.1} parent=5 // pred_fallthru
        _
      %p1714 = scmp.le.s32.totalorder 2, %s11
      // Predicated region
      $region110: #{refine_unit_pallas.1} parent=5 // pred_check
        %p1715 = pneg %p1714
      $region111: #{refine_unit_pallas.1} parent=5 // pred_check_branch
        %1717 = sbr.rel (%p1715) target = $region113
      $region112: #{refine_unit_pallas.1} parent=5 // pred_region
        %s1718 = ssub.s32 %s11, 2
        // Predicated region
        $region114: #{refine_unit_pallas.1} parent=112 // pred_check
          %p1719 = pneg %p160
        $region115: #{refine_unit_pallas.1} parent=112 // pred_check_branch
          %1721 = sbr.rel (%p1719) target = $region117
        $region116: #{refine_unit_pallas.1} parent=112 // pred_region
          %s1722 = sand.u32 %s145, 1
          %s1723 = sand.u32 %s145, 1
          %s1724 = smul.addr %s1723, 448
          %s1725 = scalar_lea.vmem [#allocation4], %s1724
        $region117: #{refine_unit_pallas.1} parent=112 // pred_fallthru
          _
      $region113: #{refine_unit_pallas.1} parent=5 // pred_fallthru
        _
    $region6: #{refine_unit_pallas.1} parent=1 // loop_footer
      %s15 = sadd.s32 1, %s11
    $region7: #{refine_unit_pallas.1} parent=1 // loop_footer_branch
      %10 = sbr.rel target = $region3
    $region8: #{refine_unit_pallas.1} parent=1 // loop_exit
      _

</llo_original>
